<compile_context>
chip_gen: v5e
topology: v5e:2x2
jax: 0.10.0
libtpu: 0.0.40
codegen_flags: <defaults>
</compile_context>

<pallas_src>
import functools

import numpy as np
import jax
import jax.numpy as jnp
from jax import lax
from jax.experimental import pallas as pl
from jax.experimental.pallas import tpu as pltpu

VOCAB = 16
D_MODEL = 32
N_HEADS = 2
D_HEAD = D_MODEL // N_HEADS
N_LAYERS = 2
D_FF = 4 * D_MODEL
MAX_T = 8
LANES = 128
LOGIT_PAD = LANES          # lane-dense output slab; sliced to VOCAB outside

# ---- bf16 weight-slab row layout (all offsets multiples of 16) ----
_W_WTE = 0                                   # (VOCAB, D_MODEL)
_W_L0 = _W_WTE + VOCAB                       # 16
_W_QKV = 0                                   # (D_MODEL, 3*D_MODEL), Q cols pre-scaled
_W_O = _W_QKV + D_MODEL                      # 32
_W_FF1 = _W_O + D_MODEL                      # 64
_W_FF2 = _W_FF1 + D_MODEL                    # 96
_W_LSTRIDE = _W_FF2 + D_FF                   # 224
_W_HEAD = _W_L0 + N_LAYERS * _W_LSTRIDE      # 464  (D_MODEL, LOGIT_PAD)
W_ROWS = _W_HEAD + D_MODEL                   # 496

# ---- f32 vector-slab row layout (LN params, biases, positional emb) ----
_V_PE = 0                                    # (MAX_T, D_MODEL)
_V_L0 = _V_PE + MAX_T                        # 8
(_V_LN1G, _V_LN1B, _V_BQKV, _V_BO,
 _V_LN2G, _V_LN2B, _V_B1, _V_B2) = range(8)
_V_LSTRIDE = 8
_V_FIN = _V_L0 + N_LAYERS * _V_LSTRIDE       # 24 : lnf_g, lnf_b, head_b, pad
V_ROWS = _V_FIN + 8                          # 32


def _vmem():
    return pl.BlockSpec(memory_space=pltpu.MemorySpace.VMEM)


def _layer_norm(x, g, b):
    # mean(x) and mean(x*x) are independent reductions -> the two XLU
    # reductions can overlap (review item).
    mu = jnp.mean(x, axis=-1, keepdims=True)
    ms = jnp.mean(x * x, axis=-1, keepdims=True)
    var = ms - mu * mu
    return (x - mu) * lax.rsqrt(var + 1e-5) * g + b


# --------------------------- fused forward kernel ---------------------------

def _fused_forward_kernel(tok_ref, wslab_ref, vslab_ref, *rest,
                          B, T, n_heads, d_head, n_layers, use_mask_input):
    if use_mask_input:
        bias_ref, out_ref = rest
    else:
        (out_ref,) = rest

    D = n_heads * d_head
    BT = B * T
    f32 = jnp.float32
    bf16 = jnp.bfloat16

    vv = vslab_ref[...]                                   # (V_ROWS, 128) f32

    # ---- token + positional embedding (one-hot MXU gather, no HBM h0) ----
    tok = tok_ref[...]                                    # (BT, 1) int32
    onehot = (tok == lax.broadcasted_iota(jnp.int32, (BT, VOCAB), 1)).astype(bf16)
    wte = wslab_ref[_W_WTE:_W_WTE + VOCAB, :D]            # (VOCAB, D) bf16
    emb = jnp.dot(onehot, wte, preferred_element_type=f32)  # (BT, D) f32
    pe = vv[_V_PE:_V_PE + T, :D]                          # (T, D) f32
    h = emb + jnp.concatenate([pe] * B, axis=0)           # (BT, D) residual stream

    # ---- attention bias: block-diagonal over batch + causal within batch ----
    if use_mask_input:
        bias = bias_ref[...]                              # (BT, BT) f32
    else:
        q_idx = lax.broadcasted_iota(jnp.int32, (BT, BT), 0)
        k_idx = lax.broadcasted_iota(jnp.int32, (BT, BT), 1)
        allowed = jnp.zeros((BT, BT), jnp.bool_)
        for b in range(B):   # cheap VPU compares only (no matmuls unrolled over B)
            blk = ((q_idx >= b * T) & (q_idx < (b + 1) * T)
                   & (k_idx >= b * T) & (k_idx <= q_idx))
            allowed = allowed | blk
        bias = jnp.where(allowed, 0.0, -1e30).astype(f32)

    for l in range(n_layers):                             # static, small unroll
        wbase = _W_L0 + l * _W_LSTRIDE
        vbase = _V_L0 + l * _V_LSTRIDE
        ln1_g = vv[vbase + _V_LN1G, :D]
        ln1_b = vv[vbase + _V_LN1B, :D]
        bqkv = vv[vbase + _V_BQKV, :3 * D]
        bo = vv[vbase + _V_BO, :D]
        ln2_g = vv[vbase + _V_LN2G, :D]
        ln2_b = vv[vbase + _V_LN2B, :D]
        b1 = vv[vbase + _V_B1, :D_FF]
        b2 = vv[vbase + _V_B2, :D]

        # ---- attention sub-block ----
        xn = _layer_norm(h, ln1_g, ln1_b)
        wqkv = wslab_ref[wbase + _W_QKV: wbase + _W_QKV + D, :3 * D]     # bf16
        qkv = jnp.dot(xn.astype(bf16), wqkv, preferred_element_type=f32) + bqkv
        q = qkv[:, 0 * D:1 * D]     # Q already scaled by 1/sqrt(d_head) (folded)
        k = qkv[:, 1 * D:2 * D]
        v = qkv[:, 2 * D:3 * D]

        heads = []
        for hh in range(n_heads):
            c0 = hh * d_head
            qh = q[:, c0:c0 + d_head].astype(bf16)        # (BT, Dh)
            kh = k[:, c0:c0 + d_head].astype(bf16)
            vh = v[:, c0:c0 + d_head].astype(bf16)
            # Q.K^T without an explicit transpose (contract dim 1 of both).
            s = lax.dot_general(qh, kh, (((1,), (1,)), ((), ())),
                                preferred_element_type=f32) + bias       # (BT, BT)
            m = jnp.max(s, axis=-1, keepdims=True)
            p = jnp.exp(s - m)
            denom = jnp.sum(p, axis=-1, keepdims=True)
            p = p * pl.reciprocal(denom, approx=True)     # EUP, off the VALU path
            heads.append(jnp.dot(p.astype(bf16), vh, preferred_element_type=f32))
        attn = jnp.concatenate(heads, axis=-1)            # (BT, D)

        wo = wslab_ref[wbase + _W_O: wbase + _W_O + D, :D]
        h = h + jnp.dot(attn.astype(bf16), wo, preferred_element_type=f32) + bo

        # ---- MLP sub-block ----
        xn = _layer_norm(h, ln2_g, ln2_b)
        w1 = wslab_ref[wbase + _W_FF1: wbase + _W_FF1 + D, :D_FF]
        f = jnp.dot(xn.astype(bf16), w1, preferred_element_type=f32) + b1
        f = jax.nn.gelu(f)
        w2 = wslab_ref[wbase + _W_FF2: wbase + _W_FF2 + D_FF, :D]
        h = h + jnp.dot(f.astype(bf16), w2, preferred_element_type=f32) + b2

    # ---- final LN + vocab head (128-lane-padded -> unmasked stores) ----
    lnf_g = vv[_V_FIN + 0, :D]
    lnf_b = vv[_V_FIN + 1, :D]
    head_b = vv[_V_FIN + 2, :]                            # (128,)
    xn = _layer_norm(h, lnf_g, lnf_b)
    head_w = wslab_ref[_W_HEAD:_W_HEAD + D, :]            # (D, 128) bf16
    logits = jnp.dot(xn.astype(bf16), head_w, preferred_element_type=f32) + head_b
    out_ref[...] = logits.astype(out_ref.dtype)


# ------------------------------- model glue --------------------------------

def create_forward_mask(T_q, T_k):
    # same semantics as the torch helper: True above the diagonal == masked
    return jnp.triu(jnp.ones((1, T_q, T_k), dtype=jnp.uint8), k=1) == 1


def init_params(key):
    keys = jax.random.split(key, 3 + N_LAYERS)

    def w(k, shape, scale=0.02):
        return scale * jax.random.normal(k, shape, dtype=jnp.float32)

    params = {
        "wte": w(keys[0], (VOCAB, D_MODEL)),
        "pe": w(keys[1], (MAX_T, D_MODEL)),
        "ln_f_g": jnp.ones((D_MODEL,), jnp.float32),
        "ln_f_b": jnp.zeros((D_MODEL,), jnp.float32),
        "head_w": w(keys[2], (D_MODEL, VOCAB)),
        "head_b": jnp.zeros((VOCAB,), jnp.float32),
        "blocks": [],
    }
    for i in range(N_LAYERS):
        bk = jax.random.split(keys[3 + i], 6)
        params["blocks"].append({
            "ln1_g": jnp.ones((D_MODEL,), jnp.float32),
            "ln1_b": jnp.zeros((D_MODEL,), jnp.float32),
            "wq": w(bk[0], (D_MODEL, D_MODEL)), "bq": jnp.zeros((D_MODEL,), jnp.float32),
            "wk": w(bk[1], (D_MODEL, D_MODEL)), "bk": jnp.zeros((D_MODEL,), jnp.float32),
            "wv": w(bk[2], (D_MODEL, D_MODEL)), "bv": jnp.zeros((D_MODEL,), jnp.float32),
            "wo": w(bk[3], (D_MODEL, D_MODEL)), "bo": jnp.zeros((D_MODEL,), jnp.float32),
            "ln2_g": jnp.ones((D_MODEL,), jnp.float32),
            "ln2_b": jnp.zeros((D_MODEL,), jnp.float32),
            "w1": w(bk[4], (D_MODEL, D_FF)), "b1": jnp.zeros((D_FF,), jnp.float32),
            "w2": w(bk[5], (D_FF, D_MODEL)), "b2": jnp.zeros((D_MODEL,), jnp.float32),
        })
    return params


def pack_params(params):
    """One-time host-side packing of all weights into two lane-padded slabs."""
    wslab = np.zeros((W_ROWS, LANES), np.float32)
    vslab = np.zeros((V_ROWS, LANES), np.float32)
    scale = 1.0 / np.sqrt(D_HEAD)

    wslab[_W_WTE:_W_WTE + VOCAB, :D_MODEL] = np.asarray(params["wte"])
    vslab[_V_PE:_V_PE + MAX_T, :D_MODEL] = np.asarray(params["pe"])

    for l, blk in enumerate(params["blocks"]):
        wb = _W_L0 + l * _W_LSTRIDE
        vb = _V_L0 + l * _V_LSTRIDE
        wqkv = np.concatenate([np.asarray(blk["wq"]) * scale,   # fold 1/sqrt(d_head)
                               np.asarray(blk["wk"]),
                               np.asarray(blk["wv"])], axis=1)  # (D, 3D)
        bqkv = np.concatenate([np.asarray(blk["bq"]) * scale,
                               np.asarray(blk["bk"]),
                               np.asarray(blk["bv"])], axis=0)  # (3D,)
        wslab[wb + _W_QKV: wb + _W_QKV + D_MODEL, :3 * D_MODEL] = wqkv
        wslab[wb + _W_O:   wb + _W_O + D_MODEL,   :D_MODEL] = np.asarray(blk["wo"])
        wslab[wb + _W_FF1: wb + _W_FF1 + D_MODEL, :D_FF] = np.asarray(blk["w1"])
        wslab[wb + _W_FF2: wb + _W_FF2 + D_FF,    :D_MODEL] = np.asarray(blk["w2"])
        vslab[vb + _V_LN1G, :D_MODEL] = np.asarray(blk["ln1_g"])
        vslab[vb + _V_LN1B, :D_MODEL] = np.asarray(blk["ln1_b"])
        vslab[vb + _V_BQKV, :3 * D_MODEL] = bqkv
        vslab[vb + _V_BO, :D_MODEL] = np.asarray(blk["bo"])
        vslab[vb + _V_LN2G, :D_MODEL] = np.asarray(blk["ln2_g"])
        vslab[vb + _V_LN2B, :D_MODEL] = np.asarray(blk["ln2_b"])
        vslab[vb + _V_B1, :D_FF] = np.asarray(blk["b1"])
        vslab[vb + _V_B2, :D_MODEL] = np.asarray(blk["b2"])

    wslab[_W_HEAD:_W_HEAD + D_MODEL, :VOCAB] = np.asarray(params["head_w"])
    vslab[_V_FIN + 0, :D_MODEL] = np.asarray(params["ln_f_g"])
    vslab[_V_FIN + 1, :D_MODEL] = np.asarray(params["ln_f_b"])
    vslab[_V_FIN + 2, :VOCAB] = np.asarray(params["head_b"])

    return {"wslab": jnp.asarray(wslab, jnp.bfloat16),   # matmul operands in bf16
            "vslab": jnp.asarray(vslab, jnp.float32)}    # LN/bias/pe stay f32


def ppo_agent_forward(packed, x_tokens, mask=None):
    """PPOAgent.forward(x, mask) -> actor(x, mask) logits of shape (B, T, VOCAB)."""
    B, T = x_tokens.shape
    BT = B * T
    tok = x_tokens.reshape(BT, 1).astype(jnp.int32)

    use_mask_input = mask is not None
    operands = [tok, packed["wslab"], packed["vslab"]]
    if use_mask_input:
        m = jnp.asarray(mask)
        if m.size != T * T:
            raise ValueError(
                "only a single (T, T) mask shared across the batch is supported; "
                f"got mask with {m.size} elements for T={T}")
        masked2d = m.reshape(T, T) != 0                   # True == masked
        rows = jnp.arange(BT) // T
        same_batch = rows[:, None] == rows[None, :]
        allowed = same_batch & jnp.logical_not(jnp.tile(masked2d, (B, B)))
        bias = jnp.where(allowed, 0.0, -1e30).astype(jnp.float32)
        operands.append(bias)

    kernel = functools.partial(
        _fused_forward_kernel,
        B=B, T=T, n_heads=N_HEADS, d_head=D_HEAD, n_layers=N_LAYERS,
        use_mask_input=use_mask_input)

    logits_pad = pl.pallas_call(
        kernel,
        out_shape=jax.ShapeDtypeStruct((BT, LOGIT_PAD), jnp.float32),
        in_specs=[_vmem()] * len(operands),
        out_specs=_vmem(),
    )(*operands)

    return logits_pad[:, :VOCAB].reshape(B, T, VOCAB)


if __name__ == "__main__":
    key = jax.random.PRNGKey(0)
    pkey, xkey = jax.random.split(key)
    params = init_params(pkey)
    packed = pack_params(params)          # one-time weight packing

    B, T = 2, 8
    x = jax.random.randint(xkey, (B, T), 0, VOCAB, dtype=jnp.int32)
    mask = create_forward_mask(T, T)

    fwd = jax.jit(ppo_agent_forward)
    logits_causal = fwd(packed, x)             # fast path: in-kernel causal mask
    logits_masked = fwd(packed, x, mask)       # explicit user-mask path
    jax.block_until_ready((logits_causal, logits_masked))

    assert logits_causal.shape == (B, T, VOCAB), logits_causal.shape
    assert logits_masked.shape == (B, T, VOCAB), logits_masked.shape
    assert bool(jnp.all(jnp.isfinite(logits_causal)))
    assert bool(jnp.allclose(logits_causal, logits_masked, atol=1e-5, rtol=1e-5))
    print("KERNEL_OK")
</pallas_src>

<mosaic_0001>
module attributes {stable_mosaic.version = 11 : i64} {
  func.func @_fused_forward_kernel(%arg0: memref<16x1xi32, #tpu.memory_space<vmem>>, %arg1: memref<496x128xbf16, #tpu.memory_space<vmem>>, %arg2: memref<32x128xf32, #tpu.memory_space<vmem>>, %arg3: memref<16x128xf32, #tpu.memory_space<vmem>>) attributes {dimension_semantics = [], scalar_prefetch = 0 : i64, scratch_operands = 0 : i64, tpu.core_type = #tpu.core_type<tc>} {
    %c0 = arith.constant 0 : index
    %c0_0 = arith.constant 0 : index
    %0 = vector.load %arg2[%c0, %c0_0] : memref<32x128xf32, #tpu.memory_space<vmem>>, vector<32x128xf32>
    %c0_1 = arith.constant 0 : index
    %c0_2 = arith.constant 0 : index
    %1 = vector.load %arg0[%c0_1, %c0_2] : memref<16x1xi32, #tpu.memory_space<vmem>>, vector<16x1xi32>
    %2 = tpu.iota {dimensions = array<i32: 1>} : vector<16x16xi32>
    %3 = vector.broadcast %1 : vector<16x1xi32> to vector<16x16xi32>
    %4 = arith.cmpi eq, %3, %2 : vector<16x16xi32>
    %5 = arith.extui %4 : vector<16x16xi1> to vector<16x16xi32>
    %6 = arith.sitofp %5 : vector<16x16xi32> to vector<16x16xf32>
    %7 = arith.truncf %6 : vector<16x16xf32> to vector<16x16xbf16>
    %c0_3 = arith.constant 0 : index
    %c0_4 = arith.constant 0 : index
    %8 = vector.load %arg1[%c0_3, %c0_4] : memref<496x128xbf16, #tpu.memory_space<vmem>>, vector<16x32xbf16>
    %cst = arith.constant dense<0.000000e+00> : vector<16x32xf32>
    %9 = tpu.matmul %7, %8, %cst {dimension_numbers = #tpu.dot_dimension_numbers<[1], [0], [0], [1], [0, 0, 1, 1], [], []>} : vector<16x16xbf16>, vector<16x32xbf16>, vector<16x32xf32> -> vector<16x32xf32>
    %10 = vector.extract_strided_slice %0 {offsets = [0, 0], sizes = [8, 32], strides = [1, 1]} : vector<32x128xf32> to vector<8x32xf32>
    %11 = tpu.concatenate %10, %10 in 0 : vector<8x32xf32>, vector<8x32xf32> -> vector<16x32xf32>
    %12 = arith.addf %9, %11 : vector<16x32xf32>
    %13 = tpu.iota {dimensions = array<i32: 0>} : vector<16x16xi32>
    %14 = tpu.iota {dimensions = array<i32: 1>} : vector<16x16xi32>
    %false = arith.constant false
    %15 = vector.broadcast %false : i1 to vector<16x16xi1>
    %c0_i32 = arith.constant 0 : i32
    %16 = vector.broadcast %c0_i32 : i32 to vector<16x16xi32>
    %17 = arith.cmpi sge, %13, %16 : vector<16x16xi32>
    %c8_i32 = arith.constant 8 : i32
    %18 = vector.broadcast %c8_i32 : i32 to vector<16x16xi32>
    %19 = arith.cmpi slt, %13, %18 : vector<16x16xi32>
    %20 = arith.andi %17, %19 : vector<16x16xi1>
    %c0_i32_5 = arith.constant 0 : i32
    %21 = vector.broadcast %c0_i32_5 : i32 to vector<16x16xi32>
    %22 = arith.cmpi sge, %14, %21 : vector<16x16xi32>
    %23 = arith.andi %20, %22 : vector<16x16xi1>
    %24 = arith.cmpi sle, %14, %13 : vector<16x16xi32>
    %25 = arith.andi %23, %24 : vector<16x16xi1>
    %26 = arith.ori %15, %25 : vector<16x16xi1>
    %c8_i32_6 = arith.constant 8 : i32
    %27 = vector.broadcast %c8_i32_6 : i32 to vector<16x16xi32>
    %28 = arith.cmpi sge, %13, %27 : vector<16x16xi32>
    %c16_i32 = arith.constant 16 : i32
    %29 = vector.broadcast %c16_i32 : i32 to vector<16x16xi32>
    %30 = arith.cmpi slt, %13, %29 : vector<16x16xi32>
    %31 = arith.andi %28, %30 : vector<16x16xi1>
    %c8_i32_7 = arith.constant 8 : i32
    %32 = vector.broadcast %c8_i32_7 : i32 to vector<16x16xi32>
    %33 = arith.cmpi sge, %14, %32 : vector<16x16xi32>
    %34 = arith.andi %31, %33 : vector<16x16xi1>
    %35 = arith.cmpi sle, %14, %13 : vector<16x16xi32>
    %36 = arith.andi %34, %35 : vector<16x16xi1>
    %37 = arith.ori %26, %36 : vector<16x16xi1>
    %cst_8 = arith.constant 0.000000e+00 : f32
    %cst_9 = arith.constant -1.000000e+30 : f32
    %38 = vector.broadcast %cst_8 : f32 to vector<16x16xf32>
    %39 = vector.broadcast %cst_9 : f32 to vector<16x16xf32>
    %40 = arith.select %37, %38, %39 : vector<16x16xi1>, vector<16x16xf32>
    %41 = vector.extract_strided_slice %0 {offsets = [8, 0], sizes = [1, 32], strides = [1, 1]} : vector<32x128xf32> to vector<1x32xf32>
    %42 = vector.shape_cast %41 : vector<1x32xf32> to vector<32xf32>
    %43 = vector.extract_strided_slice %0 {offsets = [9, 0], sizes = [1, 32], strides = [1, 1]} : vector<32x128xf32> to vector<1x32xf32>
    %44 = vector.shape_cast %43 : vector<1x32xf32> to vector<32xf32>
    %45 = vector.extract_strided_slice %0 {offsets = [10, 0], sizes = [1, 96], strides = [1, 1]} : vector<32x128xf32> to vector<1x96xf32>
    %46 = vector.shape_cast %45 : vector<1x96xf32> to vector<96xf32>
    %47 = vector.extract_strided_slice %0 {offsets = [11, 0], sizes = [1, 32], strides = [1, 1]} : vector<32x128xf32> to vector<1x32xf32>
    %48 = vector.shape_cast %47 : vector<1x32xf32> to vector<32xf32>
    %49 = vector.extract_strided_slice %0 {offsets = [12, 0], sizes = [1, 32], strides = [1, 1]} : vector<32x128xf32> to vector<1x32xf32>
    %50 = vector.shape_cast %49 : vector<1x32xf32> to vector<32xf32>
    %51 = vector.extract_strided_slice %0 {offsets = [13, 0], sizes = [1, 32], strides = [1, 1]} : vector<32x128xf32> to vector<1x32xf32>
    %52 = vector.shape_cast %51 : vector<1x32xf32> to vector<32xf32>
    %53 = vector.extract_strided_slice %0 {offsets = [14, 0], sizes = [1, 128], strides = [1, 1]} : vector<32x128xf32> to vector<1x128xf32>
    %54 = vector.shape_cast %53 : vector<1x128xf32> to vector<128xf32>
    %55 = vector.extract_strided_slice %0 {offsets = [15, 0], sizes = [1, 32], strides = [1, 1]} : vector<32x128xf32> to vector<1x32xf32>
    %56 = vector.shape_cast %55 : vector<1x32xf32> to vector<32xf32>
    %cst_10 = arith.constant dense<0.000000e+00> : vector<16xf32>
    %57 = vector.multi_reduction <add>, %12, %cst_10 [1] : vector<16x32xf32> to vector<16xf32>
    %58 = vector.shape_cast %57 : vector<16xf32> to vector<16x1xf32>
    %cst_11 = arith.constant 3.200000e+01 : f32
    %59 = vector.broadcast %cst_11 : f32 to vector<16x1xf32>
    %60 = arith.divf %58, %59 : vector<16x1xf32>
    %61 = arith.mulf %12, %12 : vector<16x32xf32>
    %cst_12 = arith.constant dense<0.000000e+00> : vector<16xf32>
    %62 = vector.multi_reduction <add>, %61, %cst_12 [1] : vector<16x32xf32> to vector<16xf32>
    %63 = vector.shape_cast %62 : vector<16xf32> to vector<16x1xf32>
    %cst_13 = arith.constant 3.200000e+01 : f32
    %64 = vector.broadcast %cst_13 : f32 to vector<16x1xf32>
    %65 = arith.divf %63, %64 : vector<16x1xf32>
    %66 = arith.mulf %60, %60 : vector<16x1xf32>
    %67 = arith.subf %65, %66 : vector<16x1xf32>
    %68 = vector.broadcast %60 : vector<16x1xf32> to vector<16x32xf32>
    %69 = arith.subf %12, %68 : vector<16x32xf32>
    %cst_14 = arith.constant 9.99999974E-6 : f32
    %70 = vector.broadcast %cst_14 : f32 to vector<16x1xf32>
    %71 = arith.addf %67, %70 : vector<16x1xf32>
    %72 = math.rsqrt %71 : vector<16x1xf32>
    %73 = vector.broadcast %72 : vector<16x1xf32> to vector<16x32xf32>
    %74 = arith.mulf %69, %73 : vector<16x32xf32>
    %75 = vector.shape_cast %42 : vector<32xf32> to vector<1x32xf32>
    %76 = vector.broadcast %75 : vector<1x32xf32> to vector<16x32xf32>
    %77 = arith.mulf %74, %76 : vector<16x32xf32>
    %78 = vector.shape_cast %44 : vector<32xf32> to vector<1x32xf32>
    %79 = vector.broadcast %78 : vector<1x32xf32> to vector<16x32xf32>
    %80 = arith.addf %77, %79 : vector<16x32xf32>
    %c16 = arith.constant 16 : index
    %c0_15 = arith.constant 0 : index
    %81 = vector.load %arg1[%c16, %c0_15] : memref<496x128xbf16, #tpu.memory_space<vmem>>, vector<32x96xbf16>
    %82 = arith.truncf %80 : vector<16x32xf32> to vector<16x32xbf16>
    %cst_16 = arith.constant dense<0.000000e+00> : vector<16x96xf32>
    %83 = tpu.matmul %82, %81, %cst_16 {dimension_numbers = #tpu.dot_dimension_numbers<[1], [0], [0], [1], [0, 0, 1, 1], [], []>} : vector<16x32xbf16>, vector<32x96xbf16>, vector<16x96xf32> -> vector<16x96xf32>
    %84 = vector.shape_cast %46 : vector<96xf32> to vector<1x96xf32>
    %85 = vector.broadcast %84 : vector<1x96xf32> to vector<16x96xf32>
    %86 = arith.addf %83, %85 : vector<16x96xf32>
    %87 = vector.extract_strided_slice %86 {offsets = [0, 0], sizes = [16, 32], strides = [1, 1]} : vector<16x96xf32> to vector<16x32xf32>
    %88 = vector.extract_strided_slice %86 {offsets = [0, 32], sizes = [16, 32], strides = [1, 1]} : vector<16x96xf32> to vector<16x32xf32>
    %89 = vector.extract_strided_slice %86 {offsets = [0, 64], sizes = [16, 32], strides = [1, 1]} : vector<16x96xf32> to vector<16x32xf32>
    %90 = vector.extract_strided_slice %87 {offsets = [0, 0], sizes = [16, 16], strides = [1, 1]} : vector<16x32xf32> to vector<16x16xf32>
    %91 = arith.truncf %90 : vector<16x16xf32> to vector<16x16xbf16>
    %92 = vector.extract_strided_slice %88 {offsets = [0, 0], sizes = [16, 16], strides = [1, 1]} : vector<16x32xf32> to vector<16x16xf32>
    %93 = arith.truncf %92 : vector<16x16xf32> to vector<16x16xbf16>
    %94 = vector.extract_strided_slice %89 {offsets = [0, 0], sizes = [16, 16], strides = [1, 1]} : vector<16x32xf32> to vector<16x16xf32>
    %95 = arith.truncf %94 : vector<16x16xf32> to vector<16x16xbf16>
    %cst_17 = arith.constant dense<0.000000e+00> : vector<16x16xf32>
    %96 = tpu.matmul %91, %93, %cst_17 {dimension_numbers = #tpu.dot_dimension_numbers<[1], [1], [0], [0], [0, 0, 1, 0], [], []>} : vector<16x16xbf16>, vector<16x16xbf16>, vector<16x16xf32> -> vector<16x16xf32>
    %97 = arith.addf %96, %40 : vector<16x16xf32>
    %cst_18 = arith.constant dense<0xFF800000> : vector<16xf32>
    %98 = vector.multi_reduction <maximumf>, %97, %cst_18 [1] : vector<16x16xf32> to vector<16xf32>
    %99 = vector.shape_cast %98 : vector<16xf32> to vector<16x1xf32>
    %100 = vector.broadcast %99 : vector<16x1xf32> to vector<16x16xf32>
    %101 = arith.subf %97, %100 : vector<16x16xf32>
    %102 = math.exp %101 : vector<16x16xf32>
    %cst_19 = arith.constant dense<0.000000e+00> : vector<16xf32>
    %103 = vector.multi_reduction <add>, %102, %cst_19 [1] : vector<16x16xf32> to vector<16xf32>
    %104 = vector.shape_cast %103 : vector<16xf32> to vector<16x1xf32>
    %105 = tpu.reciprocal %104 {approx = true} : vector<16x1xf32> -> vector<16x1xf32>
    %106 = vector.broadcast %105 : vector<16x1xf32> to vector<16x16xf32>
    %107 = arith.mulf %102, %106 : vector<16x16xf32>
    %108 = arith.truncf %107 : vector<16x16xf32> to vector<16x16xbf16>
    %cst_20 = arith.constant dense<0.000000e+00> : vector<16x16xf32>
    %109 = tpu.matmul %108, %95, %cst_20 {dimension_numbers = #tpu.dot_dimension_numbers<[1], [0], [0], [1], [0, 0, 1, 1], [], []>} : vector<16x16xbf16>, vector<16x16xbf16>, vector<16x16xf32> -> vector<16x16xf32>
    %110 = vector.extract_strided_slice %87 {offsets = [0, 16], sizes = [16, 16], strides = [1, 1]} : vector<16x32xf32> to vector<16x16xf32>
    %111 = arith.truncf %110 : vector<16x16xf32> to vector<16x16xbf16>
    %112 = vector.extract_strided_slice %88 {offsets = [0, 16], sizes = [16, 16], strides = [1, 1]} : vector<16x32xf32> to vector<16x16xf32>
    %113 = arith.truncf %112 : vector<16x16xf32> to vector<16x16xbf16>
    %114 = vector.extract_strided_slice %89 {offsets = [0, 16], sizes = [16, 16], strides = [1, 1]} : vector<16x32xf32> to vector<16x16xf32>
    %115 = arith.truncf %114 : vector<16x16xf32> to vector<16x16xbf16>
    %cst_21 = arith.constant dense<0.000000e+00> : vector<16x16xf32>
    %116 = tpu.matmul %111, %113, %cst_21 {dimension_numbers = #tpu.dot_dimension_numbers<[1], [1], [0], [0], [0, 0, 1, 0], [], []>} : vector<16x16xbf16>, vector<16x16xbf16>, vector<16x16xf32> -> vector<16x16xf32>
    %117 = arith.addf %116, %40 : vector<16x16xf32>
    %cst_22 = arith.constant dense<0xFF800000> : vector<16xf32>
    %118 = vector.multi_reduction <maximumf>, %117, %cst_22 [1] : vector<16x16xf32> to vector<16xf32>
    %119 = vector.shape_cast %118 : vector<16xf32> to vector<16x1xf32>
    %120 = vector.broadcast %119 : vector<16x1xf32> to vector<16x16xf32>
    %121 = arith.subf %117, %120 : vector<16x16xf32>
    %122 = math.exp %121 : vector<16x16xf32>
    %cst_23 = arith.constant dense<0.000000e+00> : vector<16xf32>
    %123 = vector.multi_reduction <add>, %122, %cst_23 [1] : vector<16x16xf32> to vector<16xf32>
    %124 = vector.shape_cast %123 : vector<16xf32> to vector<16x1xf32>
    %125 = tpu.reciprocal %124 {approx = true} : vector<16x1xf32> -> vector<16x1xf32>
    %126 = vector.broadcast %125 : vector<16x1xf32> to vector<16x16xf32>
    %127 = arith.mulf %122, %126 : vector<16x16xf32>
    %128 = arith.truncf %127 : vector<16x16xf32> to vector<16x16xbf16>
    %cst_24 = arith.constant dense<0.000000e+00> : vector<16x16xf32>
    %129 = tpu.matmul %128, %115, %cst_24 {dimension_numbers = #tpu.dot_dimension_numbers<[1], [0], [0], [1], [0, 0, 1, 1], [], []>} : vector<16x16xbf16>, vector<16x16xbf16>, vector<16x16xf32> -> vector<16x16xf32>
    %130 = tpu.concatenate %109, %129 in 1 : vector<16x16xf32>, vector<16x16xf32> -> vector<16x32xf32>
    %c48 = arith.constant 48 : index
    %c0_25 = arith.constant 0 : index
    %131 = vector.load %arg1[%c48, %c0_25] : memref<496x128xbf16, #tpu.memory_space<vmem>>, vector<32x32xbf16>
    %132 = arith.truncf %130 : vector<16x32xf32> to vector<16x32xbf16>
    %cst_26 = arith.constant dense<0.000000e+00> : vector<16x32xf32>
    %133 = tpu.matmul %132, %131, %cst_26 {dimension_numbers = #tpu.dot_dimension_numbers<[1], [0], [0], [1], [0, 0, 1, 1], [], []>} : vector<16x32xbf16>, vector<32x32xbf16>, vector<16x32xf32> -> vector<16x32xf32>
    %134 = arith.addf %12, %133 : vector<16x32xf32>
    %135 = vector.shape_cast %48 : vector<32xf32> to vector<1x32xf32>
    %136 = vector.broadcast %135 : vector<1x32xf32> to vector<16x32xf32>
    %137 = arith.addf %134, %136 : vector<16x32xf32>
    %cst_27 = arith.constant dense<0.000000e+00> : vector<16xf32>
    %138 = vector.multi_reduction <add>, %137, %cst_27 [1] : vector<16x32xf32> to vector<16xf32>
    %139 = vector.shape_cast %138 : vector<16xf32> to vector<16x1xf32>
    %cst_28 = arith.constant 3.200000e+01 : f32
    %140 = vector.broadcast %cst_28 : f32 to vector<16x1xf32>
    %141 = arith.divf %139, %140 : vector<16x1xf32>
    %142 = arith.mulf %137, %137 : vector<16x32xf32>
    %cst_29 = arith.constant dense<0.000000e+00> : vector<16xf32>
    %143 = vector.multi_reduction <add>, %142, %cst_29 [1] : vector<16x32xf32> to vector<16xf32>
    %144 = vector.shape_cast %143 : vector<16xf32> to vector<16x1xf32>
    %cst_30 = arith.constant 3.200000e+01 : f32
    %145 = vector.broadcast %cst_30 : f32 to vector<16x1xf32>
    %146 = arith.divf %144, %145 : vector<16x1xf32>
    %147 = arith.mulf %141, %141 : vector<16x1xf32>
    %148 = arith.subf %146, %147 : vector<16x1xf32>
    %149 = vector.broadcast %141 : vector<16x1xf32> to vector<16x32xf32>
    %150 = arith.subf %137, %149 : vector<16x32xf32>
    %cst_31 = arith.constant 9.99999974E-6 : f32
    %151 = vector.broadcast %cst_31 : f32 to vector<16x1xf32>
    %152 = arith.addf %148, %151 : vector<16x1xf32>
    %153 = math.rsqrt %152 : vector<16x1xf32>
    %154 = vector.broadcast %153 : vector<16x1xf32> to vector<16x32xf32>
    %155 = arith.mulf %150, %154 : vector<16x32xf32>
    %156 = vector.shape_cast %50 : vector<32xf32> to vector<1x32xf32>
    %157 = vector.broadcast %156 : vector<1x32xf32> to vector<16x32xf32>
    %158 = arith.mulf %155, %157 : vector<16x32xf32>
    %159 = vector.shape_cast %52 : vector<32xf32> to vector<1x32xf32>
    %160 = vector.broadcast %159 : vector<1x32xf32> to vector<16x32xf32>
    %161 = arith.addf %158, %160 : vector<16x32xf32>
    %c80 = arith.constant 80 : index
    %c0_32 = arith.constant 0 : index
    %162 = vector.load %arg1[%c80, %c0_32] : memref<496x128xbf16, #tpu.memory_space<vmem>>, vector<32x128xbf16>
    %163 = arith.truncf %161 : vector<16x32xf32> to vector<16x32xbf16>
    %cst_33 = arith.constant dense<0.000000e+00> : vector<16x128xf32>
    %164 = tpu.matmul %163, %162, %cst_33 {dimension_numbers = #tpu.dot_dimension_numbers<[1], [0], [0], [1], [0, 0, 1, 1], [], []>} : vector<16x32xbf16>, vector<32x128xbf16>, vector<16x128xf32> -> vector<16x128xf32>
    %165 = vector.shape_cast %54 : vector<128xf32> to vector<1x128xf32>
    %166 = vector.broadcast %165 : vector<1x128xf32> to vector<16x128xf32>
    %167 = arith.addf %164, %166 : vector<16x128xf32>
    %168 = arith.mulf %167, %167 : vector<16x128xf32>
    %169 = arith.mulf %167, %168 : vector<16x128xf32>
    %cst_34 = arith.constant 4.471500e-02 : f32
    %170 = vector.broadcast %cst_34 : f32 to vector<16x128xf32>
    %171 = arith.mulf %170, %169 : vector<16x128xf32>
    %172 = arith.addf %167, %171 : vector<16x128xf32>
    %cst_35 = arith.constant 0.797884583 : f32
    %173 = vector.broadcast %cst_35 : f32 to vector<16x128xf32>
    %174 = arith.mulf %173, %172 : vector<16x128xf32>
    %175 = math.tanh %174 : vector<16x128xf32>
    %cst_36 = arith.constant 1.000000e+00 : f32
    %176 = vector.broadcast %cst_36 : f32 to vector<16x128xf32>
    %177 = arith.addf %176, %175 : vector<16x128xf32>
    %cst_37 = arith.constant 5.000000e-01 : f32
    %178 = vector.broadcast %cst_37 : f32 to vector<16x128xf32>
    %179 = arith.mulf %178, %177 : vector<16x128xf32>
    %180 = arith.mulf %167, %179 : vector<16x128xf32>
    %c112 = arith.constant 112 : index
    %c0_38 = arith.constant 0 : index
    %181 = vector.load %arg1[%c112, %c0_38] : memref<496x128xbf16, #tpu.memory_space<vmem>>, vector<128x32xbf16>
    %182 = arith.truncf %180 : vector<16x128xf32> to vector<16x128xbf16>
    %cst_39 = arith.constant dense<0.000000e+00> : vector<16x32xf32>
    %183 = tpu.matmul %182, %181, %cst_39 {dimension_numbers = #tpu.dot_dimension_numbers<[1], [0], [0], [1], [0, 0, 1, 1], [], []>} : vector<16x128xbf16>, vector<128x32xbf16>, vector<16x32xf32> -> vector<16x32xf32>
    %184 = arith.addf %137, %183 : vector<16x32xf32>
    %185 = vector.shape_cast %56 : vector<32xf32> to vector<1x32xf32>
    %186 = vector.broadcast %185 : vector<1x32xf32> to vector<16x32xf32>
    %187 = arith.addf %184, %186 : vector<16x32xf32>
    %188 = vector.extract_strided_slice %0 {offsets = [16, 0], sizes = [1, 32], strides = [1, 1]} : vector<32x128xf32> to vector<1x32xf32>
    %189 = vector.shape_cast %188 : vector<1x32xf32> to vector<32xf32>
    %190 = vector.extract_strided_slice %0 {offsets = [17, 0], sizes = [1, 32], strides = [1, 1]} : vector<32x128xf32> to vector<1x32xf32>
    %191 = vector.shape_cast %190 : vector<1x32xf32> to vector<32xf32>
    %192 = vector.extract_strided_slice %0 {offsets = [18, 0], sizes = [1, 96], strides = [1, 1]} : vector<32x128xf32> to vector<1x96xf32>
    %193 = vector.shape_cast %192 : vector<1x96xf32> to vector<96xf32>
    %194 = vector.extract_strided_slice %0 {offsets = [19, 0], sizes = [1, 32], strides = [1, 1]} : vector<32x128xf32> to vector<1x32xf32>
    %195 = vector.shape_cast %194 : vector<1x32xf32> to vector<32xf32>
    %196 = vector.extract_strided_slice %0 {offsets = [20, 0], sizes = [1, 32], strides = [1, 1]} : vector<32x128xf32> to vector<1x32xf32>
    %197 = vector.shape_cast %196 : vector<1x32xf32> to vector<32xf32>
    %198 = vector.extract_strided_slice %0 {offsets = [21, 0], sizes = [1, 32], strides = [1, 1]} : vector<32x128xf32> to vector<1x32xf32>
    %199 = vector.shape_cast %198 : vector<1x32xf32> to vector<32xf32>
    %200 = vector.extract_strided_slice %0 {offsets = [22, 0], sizes = [1, 128], strides = [1, 1]} : vector<32x128xf32> to vector<1x128xf32>
    %201 = vector.shape_cast %200 : vector<1x128xf32> to vector<128xf32>
    %202 = vector.extract_strided_slice %0 {offsets = [23, 0], sizes = [1, 32], strides = [1, 1]} : vector<32x128xf32> to vector<1x32xf32>
    %203 = vector.shape_cast %202 : vector<1x32xf32> to vector<32xf32>
    %cst_40 = arith.constant dense<0.000000e+00> : vector<16xf32>
    %204 = vector.multi_reduction <add>, %187, %cst_40 [1] : vector<16x32xf32> to vector<16xf32>
    %205 = vector.shape_cast %204 : vector<16xf32> to vector<16x1xf32>
    %cst_41 = arith.constant 3.200000e+01 : f32
    %206 = vector.broadcast %cst_41 : f32 to vector<16x1xf32>
    %207 = arith.divf %205, %206 : vector<16x1xf32>
    %208 = arith.mulf %187, %187 : vector<16x32xf32>
    %cst_42 = arith.constant dense<0.000000e+00> : vector<16xf32>
    %209 = vector.multi_reduction <add>, %208, %cst_42 [1] : vector<16x32xf32> to vector<16xf32>
    %210 = vector.shape_cast %209 : vector<16xf32> to vector<16x1xf32>
    %cst_43 = arith.constant 3.200000e+01 : f32
    %211 = vector.broadcast %cst_43 : f32 to vector<16x1xf32>
    %212 = arith.divf %210, %211 : vector<16x1xf32>
    %213 = arith.mulf %207, %207 : vector<16x1xf32>
    %214 = arith.subf %212, %213 : vector<16x1xf32>
    %215 = vector.broadcast %207 : vector<16x1xf32> to vector<16x32xf32>
    %216 = arith.subf %187, %215 : vector<16x32xf32>
    %cst_44 = arith.constant 9.99999974E-6 : f32
    %217 = vector.broadcast %cst_44 : f32 to vector<16x1xf32>
    %218 = arith.addf %214, %217 : vector<16x1xf32>
    %219 = math.rsqrt %218 : vector<16x1xf32>
    %220 = vector.broadcast %219 : vector<16x1xf32> to vector<16x32xf32>
    %221 = arith.mulf %216, %220 : vector<16x32xf32>
    %222 = vector.shape_cast %189 : vector<32xf32> to vector<1x32xf32>
    %223 = vector.broadcast %222 : vector<1x32xf32> to vector<16x32xf32>
    %224 = arith.mulf %221, %223 : vector<16x32xf32>
    %225 = vector.shape_cast %191 : vector<32xf32> to vector<1x32xf32>
    %226 = vector.broadcast %225 : vector<1x32xf32> to vector<16x32xf32>
    %227 = arith.addf %224, %226 : vector<16x32xf32>
    %c240 = arith.constant 240 : index
    %c0_45 = arith.constant 0 : index
    %228 = vector.load %arg1[%c240, %c0_45] : memref<496x128xbf16, #tpu.memory_space<vmem>>, vector<32x96xbf16>
    %229 = arith.truncf %227 : vector<16x32xf32> to vector<16x32xbf16>
    %cst_46 = arith.constant dense<0.000000e+00> : vector<16x96xf32>
    %230 = tpu.matmul %229, %228, %cst_46 {dimension_numbers = #tpu.dot_dimension_numbers<[1], [0], [0], [1], [0, 0, 1, 1], [], []>} : vector<16x32xbf16>, vector<32x96xbf16>, vector<16x96xf32> -> vector<16x96xf32>
    %231 = vector.shape_cast %193 : vector<96xf32> to vector<1x96xf32>
    %232 = vector.broadcast %231 : vector<1x96xf32> to vector<16x96xf32>
    %233 = arith.addf %230, %232 : vector<16x96xf32>
    %234 = vector.extract_strided_slice %233 {offsets = [0, 0], sizes = [16, 32], strides = [1, 1]} : vector<16x96xf32> to vector<16x32xf32>
    %235 = vector.extract_strided_slice %233 {offsets = [0, 32], sizes = [16, 32], strides = [1, 1]} : vector<16x96xf32> to vector<16x32xf32>
    %236 = vector.extract_strided_slice %233 {offsets = [0, 64], sizes = [16, 32], strides = [1, 1]} : vector<16x96xf32> to vector<16x32xf32>
    %237 = vector.extract_strided_slice %234 {offsets = [0, 0], sizes = [16, 16], strides = [1, 1]} : vector<16x32xf32> to vector<16x16xf32>
    %238 = arith.truncf %237 : vector<16x16xf32> to vector<16x16xbf16>
    %239 = vector.extract_strided_slice %235 {offsets = [0, 0], sizes = [16, 16], strides = [1, 1]} : vector<16x32xf32> to vector<16x16xf32>
    %240 = arith.truncf %239 : vector<16x16xf32> to vector<16x16xbf16>
    %241 = vector.extract_strided_slice %236 {offsets = [0, 0], sizes = [16, 16], strides = [1, 1]} : vector<16x32xf32> to vector<16x16xf32>
    %242 = arith.truncf %241 : vector<16x16xf32> to vector<16x16xbf16>
    %cst_47 = arith.constant dense<0.000000e+00> : vector<16x16xf32>
    %243 = tpu.matmul %238, %240, %cst_47 {dimension_numbers = #tpu.dot_dimension_numbers<[1], [1], [0], [0], [0, 0, 1, 0], [], []>} : vector<16x16xbf16>, vector<16x16xbf16>, vector<16x16xf32> -> vector<16x16xf32>
    %244 = arith.addf %243, %40 : vector<16x16xf32>
    %cst_48 = arith.constant dense<0xFF800000> : vector<16xf32>
    %245 = vector.multi_reduction <maximumf>, %244, %cst_48 [1] : vector<16x16xf32> to vector<16xf32>
    %246 = vector.shape_cast %245 : vector<16xf32> to vector<16x1xf32>
    %247 = vector.broadcast %246 : vector<16x1xf32> to vector<16x16xf32>
    %248 = arith.subf %244, %247 : vector<16x16xf32>
    %249 = math.exp %248 : vector<16x16xf32>
    %cst_49 = arith.constant dense<0.000000e+00> : vector<16xf32>
    %250 = vector.multi_reduction <add>, %249, %cst_49 [1] : vector<16x16xf32> to vector<16xf32>
    %251 = vector.shape_cast %250 : vector<16xf32> to vector<16x1xf32>
    %252 = tpu.reciprocal %251 {approx = true} : vector<16x1xf32> -> vector<16x1xf32>
    %253 = vector.broadcast %252 : vector<16x1xf32> to vector<16x16xf32>
    %254 = arith.mulf %249, %253 : vector<16x16xf32>
    %255 = arith.truncf %254 : vector<16x16xf32> to vector<16x16xbf16>
    %cst_50 = arith.constant dense<0.000000e+00> : vector<16x16xf32>
    %256 = tpu.matmul %255, %242, %cst_50 {dimension_numbers = #tpu.dot_dimension_numbers<[1], [0], [0], [1], [0, 0, 1, 1], [], []>} : vector<16x16xbf16>, vector<16x16xbf16>, vector<16x16xf32> -> vector<16x16xf32>
    %257 = vector.extract_strided_slice %234 {offsets = [0, 16], sizes = [16, 16], strides = [1, 1]} : vector<16x32xf32> to vector<16x16xf32>
    %258 = arith.truncf %257 : vector<16x16xf32> to vector<16x16xbf16>
    %259 = vector.extract_strided_slice %235 {offsets = [0, 16], sizes = [16, 16], strides = [1, 1]} : vector<16x32xf32> to vector<16x16xf32>
    %260 = arith.truncf %259 : vector<16x16xf32> to vector<16x16xbf16>
    %261 = vector.extract_strided_slice %236 {offsets = [0, 16], sizes = [16, 16], strides = [1, 1]} : vector<16x32xf32> to vector<16x16xf32>
    %262 = arith.truncf %261 : vector<16x16xf32> to vector<16x16xbf16>
    %cst_51 = arith.constant dense<0.000000e+00> : vector<16x16xf32>
    %263 = tpu.matmul %258, %260, %cst_51 {dimension_numbers = #tpu.dot_dimension_numbers<[1], [1], [0], [0], [0, 0, 1, 0], [], []>} : vector<16x16xbf16>, vector<16x16xbf16>, vector<16x16xf32> -> vector<16x16xf32>
    %264 = arith.addf %263, %40 : vector<16x16xf32>
    %cst_52 = arith.constant dense<0xFF800000> : vector<16xf32>
    %265 = vector.multi_reduction <maximumf>, %264, %cst_52 [1] : vector<16x16xf32> to vector<16xf32>
    %266 = vector.shape_cast %265 : vector<16xf32> to vector<16x1xf32>
    %267 = vector.broadcast %266 : vector<16x1xf32> to vector<16x16xf32>
    %268 = arith.subf %264, %267 : vector<16x16xf32>
    %269 = math.exp %268 : vector<16x16xf32>
    %cst_53 = arith.constant dense<0.000000e+00> : vector<16xf32>
    %270 = vector.multi_reduction <add>, %269, %cst_53 [1] : vector<16x16xf32> to vector<16xf32>
    %271 = vector.shape_cast %270 : vector<16xf32> to vector<16x1xf32>
    %272 = tpu.reciprocal %271 {approx = true} : vector<16x1xf32> -> vector<16x1xf32>
    %273 = vector.broadcast %272 : vector<16x1xf32> to vector<16x16xf32>
    %274 = arith.mulf %269, %273 : vector<16x16xf32>
    %275 = arith.truncf %274 : vector<16x16xf32> to vector<16x16xbf16>
    %cst_54 = arith.constant dense<0.000000e+00> : vector<16x16xf32>
    %276 = tpu.matmul %275, %262, %cst_54 {dimension_numbers = #tpu.dot_dimension_numbers<[1], [0], [0], [1], [0, 0, 1, 1], [], []>} : vector<16x16xbf16>, vector<16x16xbf16>, vector<16x16xf32> -> vector<16x16xf32>
    %277 = tpu.concatenate %256, %276 in 1 : vector<16x16xf32>, vector<16x16xf32> -> vector<16x32xf32>
    %c272 = arith.constant 272 : index
    %c0_55 = arith.constant 0 : index
    %278 = vector.load %arg1[%c272, %c0_55] : memref<496x128xbf16, #tpu.memory_space<vmem>>, vector<32x32xbf16>
    %279 = arith.truncf %277 : vector<16x32xf32> to vector<16x32xbf16>
    %cst_56 = arith.constant dense<0.000000e+00> : vector<16x32xf32>
    %280 = tpu.matmul %279, %278, %cst_56 {dimension_numbers = #tpu.dot_dimension_numbers<[1], [0], [0], [1], [0, 0, 1, 1], [], []>} : vector<16x32xbf16>, vector<32x32xbf16>, vector<16x32xf32> -> vector<16x32xf32>
    %281 = arith.addf %187, %280 : vector<16x32xf32>
    %282 = vector.shape_cast %195 : vector<32xf32> to vector<1x32xf32>
    %283 = vector.broadcast %282 : vector<1x32xf32> to vector<16x32xf32>
    %284 = arith.addf %281, %283 : vector<16x32xf32>
    %cst_57 = arith.constant dense<0.000000e+00> : vector<16xf32>
    %285 = vector.multi_reduction <add>, %284, %cst_57 [1] : vector<16x32xf32> to vector<16xf32>
    %286 = vector.shape_cast %285 : vector<16xf32> to vector<16x1xf32>
    %cst_58 = arith.constant 3.200000e+01 : f32
    %287 = vector.broadcast %cst_58 : f32 to vector<16x1xf32>
    %288 = arith.divf %286, %287 : vector<16x1xf32>
    %289 = arith.mulf %284, %284 : vector<16x32xf32>
    %cst_59 = arith.constant dense<0.000000e+00> : vector<16xf32>
    %290 = vector.multi_reduction <add>, %289, %cst_59 [1] : vector<16x32xf32> to vector<16xf32>
    %291 = vector.shape_cast %290 : vector<16xf32> to vector<16x1xf32>
    %cst_60 = arith.constant 3.200000e+01 : f32
    %292 = vector.broadcast %cst_60 : f32 to vector<16x1xf32>
    %293 = arith.divf %291, %292 : vector<16x1xf32>
    %294 = arith.mulf %288, %288 : vector<16x1xf32>
    %295 = arith.subf %293, %294 : vector<16x1xf32>
    %296 = vector.broadcast %288 : vector<16x1xf32> to vector<16x32xf32>
    %297 = arith.subf %284, %296 : vector<16x32xf32>
    %cst_61 = arith.constant 9.99999974E-6 : f32
    %298 = vector.broadcast %cst_61 : f32 to vector<16x1xf32>
    %299 = arith.addf %295, %298 : vector<16x1xf32>
    %300 = math.rsqrt %299 : vector<16x1xf32>
    %301 = vector.broadcast %300 : vector<16x1xf32> to vector<16x32xf32>
    %302 = arith.mulf %297, %301 : vector<16x32xf32>
    %303 = vector.shape_cast %197 : vector<32xf32> to vector<1x32xf32>
    %304 = vector.broadcast %303 : vector<1x32xf32> to vector<16x32xf32>
    %305 = arith.mulf %302, %304 : vector<16x32xf32>
    %306 = vector.shape_cast %199 : vector<32xf32> to vector<1x32xf32>
    %307 = vector.broadcast %306 : vector<1x32xf32> to vector<16x32xf32>
    %308 = arith.addf %305, %307 : vector<16x32xf32>
    %c304 = arith.constant 304 : index
    %c0_62 = arith.constant 0 : index
    %309 = vector.load %arg1[%c304, %c0_62] : memref<496x128xbf16, #tpu.memory_space<vmem>>, vector<32x128xbf16>
    %310 = arith.truncf %308 : vector<16x32xf32> to vector<16x32xbf16>
    %cst_63 = arith.constant dense<0.000000e+00> : vector<16x128xf32>
    %311 = tpu.matmul %310, %309, %cst_63 {dimension_numbers = #tpu.dot_dimension_numbers<[1], [0], [0], [1], [0, 0, 1, 1], [], []>} : vector<16x32xbf16>, vector<32x128xbf16>, vector<16x128xf32> -> vector<16x128xf32>
    %312 = vector.shape_cast %201 : vector<128xf32> to vector<1x128xf32>
    %313 = vector.broadcast %312 : vector<1x128xf32> to vector<16x128xf32>
    %314 = arith.addf %311, %313 : vector<16x128xf32>
    %315 = arith.mulf %314, %314 : vector<16x128xf32>
    %316 = arith.mulf %314, %315 : vector<16x128xf32>
    %cst_64 = arith.constant 4.471500e-02 : f32
    %317 = vector.broadcast %cst_64 : f32 to vector<16x128xf32>
    %318 = arith.mulf %317, %316 : vector<16x128xf32>
    %319 = arith.addf %314, %318 : vector<16x128xf32>
    %cst_65 = arith.constant 0.797884583 : f32
    %320 = vector.broadcast %cst_65 : f32 to vector<16x128xf32>
    %321 = arith.mulf %320, %319 : vector<16x128xf32>
    %322 = math.tanh %321 : vector<16x128xf32>
    %cst_66 = arith.constant 1.000000e+00 : f32
    %323 = vector.broadcast %cst_66 : f32 to vector<16x128xf32>
    %324 = arith.addf %323, %322 : vector<16x128xf32>
    %cst_67 = arith.constant 5.000000e-01 : f32
    %325 = vector.broadcast %cst_67 : f32 to vector<16x128xf32>
    %326 = arith.mulf %325, %324 : vector<16x128xf32>
    %327 = arith.mulf %314, %326 : vector<16x128xf32>
    %c336 = arith.constant 336 : index
    %c0_68 = arith.constant 0 : index
    %328 = vector.load %arg1[%c336, %c0_68] : memref<496x128xbf16, #tpu.memory_space<vmem>>, vector<128x32xbf16>
    %329 = arith.truncf %327 : vector<16x128xf32> to vector<16x128xbf16>
    %cst_69 = arith.constant dense<0.000000e+00> : vector<16x32xf32>
    %330 = tpu.matmul %329, %328, %cst_69 {dimension_numbers = #tpu.dot_dimension_numbers<[1], [0], [0], [1], [0, 0, 1, 1], [], []>} : vector<16x128xbf16>, vector<128x32xbf16>, vector<16x32xf32> -> vector<16x32xf32>
    %331 = arith.addf %284, %330 : vector<16x32xf32>
    %332 = vector.shape_cast %203 : vector<32xf32> to vector<1x32xf32>
    %333 = vector.broadcast %332 : vector<1x32xf32> to vector<16x32xf32>
    %334 = arith.addf %331, %333 : vector<16x32xf32>
    %335 = vector.extract_strided_slice %0 {offsets = [24, 0], sizes = [1, 32], strides = [1, 1]} : vector<32x128xf32> to vector<1x32xf32>
    %336 = vector.shape_cast %335 : vector<1x32xf32> to vector<32xf32>
    %337 = vector.extract_strided_slice %0 {offsets = [25, 0], sizes = [1, 32], strides = [1, 1]} : vector<32x128xf32> to vector<1x32xf32>
    %338 = vector.shape_cast %337 : vector<1x32xf32> to vector<32xf32>
    %339 = vector.extract_strided_slice %0 {offsets = [26, 0], sizes = [1, 128], strides = [1, 1]} : vector<32x128xf32> to vector<1x128xf32>
    %340 = vector.shape_cast %339 : vector<1x128xf32> to vector<128xf32>
    %cst_70 = arith.constant dense<0.000000e+00> : vector<16xf32>
    %341 = vector.multi_reduction <add>, %334, %cst_70 [1] : vector<16x32xf32> to vector<16xf32>
    %342 = vector.shape_cast %341 : vector<16xf32> to vector<16x1xf32>
    %cst_71 = arith.constant 3.200000e+01 : f32
    %343 = vector.broadcast %cst_71 : f32 to vector<16x1xf32>
    %344 = arith.divf %342, %343 : vector<16x1xf32>
    %345 = arith.mulf %334, %334 : vector<16x32xf32>
    %cst_72 = arith.constant dense<0.000000e+00> : vector<16xf32>
    %346 = vector.multi_reduction <add>, %345, %cst_72 [1] : vector<16x32xf32> to vector<16xf32>
    %347 = vector.shape_cast %346 : vector<16xf32> to vector<16x1xf32>
    %cst_73 = arith.constant 3.200000e+01 : f32
    %348 = vector.broadcast %cst_73 : f32 to vector<16x1xf32>
    %349 = arith.divf %347, %348 : vector<16x1xf32>
    %350 = arith.mulf %344, %344 : vector<16x1xf32>
    %351 = arith.subf %349, %350 : vector<16x1xf32>
    %352 = vector.broadcast %344 : vector<16x1xf32> to vector<16x32xf32>
    %353 = arith.subf %334, %352 : vector<16x32xf32>
    %cst_74 = arith.constant 9.99999974E-6 : f32
    %354 = vector.broadcast %cst_74 : f32 to vector<16x1xf32>
    %355 = arith.addf %351, %354 : vector<16x1xf32>
    %356 = math.rsqrt %355 : vector<16x1xf32>
    %357 = vector.broadcast %356 : vector<16x1xf32> to vector<16x32xf32>
    %358 = arith.mulf %353, %357 : vector<16x32xf32>
    %359 = vector.shape_cast %336 : vector<32xf32> to vector<1x32xf32>
    %360 = vector.broadcast %359 : vector<1x32xf32> to vector<16x32xf32>
    %361 = arith.mulf %358, %360 : vector<16x32xf32>
    %362 = vector.shape_cast %338 : vector<32xf32> to vector<1x32xf32>
    %363 = vector.broadcast %362 : vector<1x32xf32> to vector<16x32xf32>
    %364 = arith.addf %361, %363 : vector<16x32xf32>
    %c464 = arith.constant 464 : index
    %c0_75 = arith.constant 0 : index
    %365 = vector.load %arg1[%c464, %c0_75] : memref<496x128xbf16, #tpu.memory_space<vmem>>, vector<32x128xbf16>
    %366 = arith.truncf %364 : vector<16x32xf32> to vector<16x32xbf16>
    %cst_76 = arith.constant dense<0.000000e+00> : vector<16x128xf32>
    %367 = tpu.matmul %366, %365, %cst_76 {dimension_numbers = #tpu.dot_dimension_numbers<[1], [0], [0], [1], [0, 0, 1, 1], [], []>} : vector<16x32xbf16>, vector<32x128xbf16>, vector<16x128xf32> -> vector<16x128xf32>
    %368 = vector.shape_cast %340 : vector<128xf32> to vector<1x128xf32>
    %369 = vector.broadcast %368 : vector<1x128xf32> to vector<16x128xf32>
    %370 = arith.addf %367, %369 : vector<16x128xf32>
    %c0_77 = arith.constant 0 : index
    %c0_78 = arith.constant 0 : index
    %371 = vector.load %arg3[%c0_77, %c0_78] : memref<16x128xf32, #tpu.memory_space<vmem>>, vector<16x128xf32>
    tpu.vector_store %arg3[%c0_77, %c0_78], %370 {strides = array<i32>} : memref<16x128xf32, #tpu.memory_space<vmem>>, vector<16x128xf32>,
    return
  }
}

</mosaic_0001>

<llo_original>
// kernel: ppo_agent_forward.1
$region0: #{ppo_agent_forward.1}
  #allocation0 [shape = 'u32[]', space=smem, size = 0x4, offset = 0x4, fixed_abs, tag = 'smem constant byte address 0x4 - core index']
  #allocation1 [shape = 'u32[72,128]{1,0:T(1,128)}', space=vmem, size = 0x9000, scoped, tag = 'internal scratch']
  %s0 = inlined_call_operand.vmem [shape: s32[16,1], index: 0, kind: input, shape index: {}]
  %s1 = inlined_call_operand.hbm [shape: bf16[496,128], index: 1, kind: input, shape index: {}]
  %s2 = inlined_call_operand.hbm [shape: f32[32,128], index: 2, kind: input, shape index: {}]
  %s3 = inlined_call_operand.vmem [shape: f32[16,128], index: 3, kind: output, shape index: {}]
  %s4 = sld [smem:[#allocation0]]
  $region30: #{ppo_agent_forward.1} parent=0
    _
  %s6 = ssub.s32 1, %s4
  %s7 = scalar_select 0, %s6, %s4
  $region1: #{ppo_agent_forward.1} parent=0
    #allocation2 [shape = 'u8[126976]{0}', space=vmem, size = 0x1f000, scoped, tag = 'input window, operand 1, single buffered']
    #allocation3 [shape = 's32[1]{0}', space=sflag, size = 0x4, scoped, tag = 'scoped memory for ppo_agent_forward.1']
    #allocation4 [shape = 'u8[16384]{0}', space=vmem, size = 0x4000, scoped, tag = 'input window, operand 2, single buffered']
    #allocation5 [shape = 's32[1]{0}', space=sflag, size = 0x4, scoped, tag = 'scoped memory for ppo_agent_forward.1']
    %8 = vsyncpa [#allocation3], 0
    %9 = vsyncpa [#allocation5], 0
    // Predicated region
    $region2: #{ppo_agent_forward.1} parent=1 // pred_check
      _
    $region3: #{ppo_agent_forward.1} parent=1 // pred_check_branch
      %11 = sbr.rel (0) target = $region5
    $region4: #{ppo_agent_forward.1} parent=1 // pred_region
      _
    $region5: #{ppo_agent_forward.1} parent=1 // pred_fallthru
      _
    // Predicated region
    $region6: #{ppo_agent_forward.1} parent=1 // pred_check
      _
    $region7: #{ppo_agent_forward.1} parent=1 // pred_check_branch
      %13 = sbr.rel (0) target = $region9
    $region8: #{ppo_agent_forward.1} parent=1 // pred_region
      %15 = vsyncadd [#allocation3], 0
      %s16 = sshll.u32 %s1, 4
      %s17 = int_to_ptr.hbm [resolvable:$true] %s16
      %s18 = sshll.u32 [#allocation2], 4
      %s19 = int_to_ptr.vmem [resolvable:$true] %s18
      %24 = dma.hbm_to_vmem [thread:$0]  %s17, 3968, %s19, [#allocation3], 64, 64, 4
    $region9: #{ppo_agent_forward.1} parent=1 // pred_fallthru
      _
    // Predicated region
    $region10: #{ppo_agent_forward.1} parent=1 // pred_check
      _
    $region11: #{ppo_agent_forward.1} parent=1 // pred_check_branch
      %26 = sbr.rel (0) target = $region13
    $region12: #{ppo_agent_forward.1} parent=1 // pred_region
      %28 = vsyncadd [#allocation5], 0
      %s29 = sshll.u32 %s2, 4
      %s30 = int_to_ptr.hbm [resolvable:$true] %s29
      %s31 = sshll.u32 [#allocation4], 4
      %s32 = int_to_ptr.vmem [resolvable:$true] %s31
      %37 = dma.hbm_to_vmem [thread:$0]  %s30, 512, %s32, [#allocation5], 128, 128, 8
    $region13: #{ppo_agent_forward.1} parent=1 // pred_fallthru
      _
    // Predicated region
    $region14: #{ppo_agent_forward.1} parent=1 // pred_check
      _
    $region15: #{ppo_agent_forward.1} parent=1 // pred_check_branch
      %39 = sbr.rel (0) target = $region17
    $region16: #{ppo_agent_forward.1} parent=1 // pred_region
      %41 = dma.done [#allocation3], 3968
    $region17: #{ppo_agent_forward.1} parent=1 // pred_fallthru
      _
    // Predicated region
    $region18: #{ppo_agent_forward.1} parent=1 // pred_check
      _
    $region19: #{ppo_agent_forward.1} parent=1 // pred_check_branch
      %43 = sbr.rel (0) target = $region21
    $region20: #{ppo_agent_forward.1} parent=1 // pred_region
      %45 = dma.done [#allocation5], 512
    $region21: #{ppo_agent_forward.1} parent=1 // pred_fallthru
      _
    %v47 = vld [vmem:[#allocation4] sm:$0xff]
    %v48 = vld [vmem:[#allocation4 + $0x8] sm:$0xff]
    %v49 = vld [vmem:[#allocation4 + $0x10] sm:$0xff]
    %v50 = vld [vmem:[#allocation4 + $0x18] sm:$0xff]
    %v51 = vld [vmem:[%s0] sm:$0xff]
    %v52 = vld [vmem:[%s0 + $0x8] sm:$0xff]
    %v53 = vlaneseq
    %v54 = vand.u32 %v53, 127
    %55 = vset.pattern.permute.xlu0 0
    %56 = vperm.xlu0 %55, %v51
    %v57 = vpop.permute.xlu0 %56
    %58 = vset.pattern.permute.xlu0 0
    %59 = vperm.xlu0 %58, %v52
    %v60 = vpop.permute.xlu0 %59
    %vm61 = vcmp.eq.s32.totalorder %v57, %v54
    %vm62 = vcmp.eq.s32.totalorder %v60, %v54
    %v63 = vsel %vm61, 1, 0
    %v64 = vsel %vm62, 1, 0
    %v65 = vcvt.s32.f32 %v63
    %v66 = vcvt.s32.f32 %v64
    %v67 = vpack.c.bf16 %v66, %v65
    %v68 = vld [vmem:[#allocation2] sm:$0xf]
    %v69 = vld [vmem:[#allocation2 + $0x4] sm:$0xf]
    %v72 = vunpack.c.l.b16 %v68
    %v73 = vunpack.c.l.b16 %v69
    %v74 = vpack.c.b16 %v73, %v72
    %vm76 = vcmask 130048
    %v78 = vsel %vm76, %v67, 0
    %80 = vmatpush.bf16.msra.mxu0 0
    %81 = vmatpush.bf16.msra.mxu0 0
    %82 = vmatpush.bf16.msra.mxu0 0
    %83 = vmatpush.bf16.msra.mxu0 0
    %84 = vmatpush.bf16.msra.mxu0 0
    %85 = vmatpush.bf16.msra.mxu0 0
    %86 = vmatpush.bf16.msra.mxu0 0
    %87 = vmatpush.bf16.msra.mxu0 %v74
    %88 = vmatmul.bf16.gmra.mxu0 %v78
    %v89 = vpop.f32.mrf.mxu0
    %v90 = vadd.f32 %v47, %v89
    %v91 = vpop.f32.mrf.mxu0
    %v92 = vadd.f32 %v47, %v91
    %93 = vdwg.mxu0
    %v94 = vlaneseq
    %v95 = vshrl.u32 %v94, 7
    %v96 = vadd.s32 %v95, 8
    %vm97 = vcmp.ge.s32.totalorder %v95, 0
    %vm98 = vcmp.ge.s32.totalorder %v96, 0
    %vm99 = vcmp.lt.s32.totalorder %v95, 8
    %vm100 = vcmp.lt.s32.totalorder %v96, 8
    %vm101 = vmand %vm97, %vm99
    %vm102 = vmand %vm98, %vm100
    %vm103 = vcmp.ge.s32.totalorder %v54, 0
    %vm104 = vmand %vm101, %vm103
    %vm105 = vmand %vm102, %vm103
    %vm106 = vcmp.le.s32.totalorder %v54, %v95
    %vm107 = vcmp.le.s32.totalorder %v54, %v96
    %vm108 = vmand %vm104, %vm106
    %vm109 = vmand %vm105, %vm107
    %vm110 = vcmp.ge.s32.totalorder %v95, 8
    %vm111 = vcmp.ge.s32.totalorder %v96, 8
    %vm112 = vcmp.lt.s32.totalorder %v95, 16
    %vm113 = vcmp.lt.s32.totalorder %v96, 16
    %vm114 = vmand %vm110, %vm112
    %vm115 = vmand %vm111, %vm113
    %vm116 = vcmp.ge.s32.totalorder %v54, 8
    %vm117 = vmand %vm114, %vm116
    %vm118 = vmand %vm115, %vm116
    %vm119 = vmand %vm117, %vm106
    %vm120 = vmand %vm118, %vm107
    %vm121 = vmor %vm108, %vm119
    %vm122 = vmor %vm109, %vm120
    %v123 = vsel %vm121, 0.0, -1e+30
    %v124 = vsel %vm122, 0.0, -1e+30
    %vm125 = vcmask 261120
    %v126 = vsel %vm125, %v90, 0.0
    %127 = vadd.xlane.f32.xlu0 %v126
    %v128 = vpop.xlane.xlu0 %127
    %v129 = vsel %vm125, %v92, 0.0
    %130 = vadd.xlane.f32.xlu0 %v129
    %v131 = vpop.xlane.xlu0 %130
    %v132 = vrcp.pop 32.0
    %v133 = vmul.f32 32.0, %v132
    %v134 = vsub.f32 1.0, %v133
    %v135 = vmul.f32 %v132, %v134
    %v136 = vadd.f32 %v132, %v135
    %vm137 = vweird.f32 %v132
    %v138 = vsel %vm137, %v132, %v136
    %v139 = vmul.f32 %v128, %v138
    %v140 = vmul.f32 %v131, %v138
    %v141 = vmul.f32 %v90, %v90
    %v142 = vmul.f32 %v92, %v92
    %v143 = vsel %vm125, %v141, 0.0
    %144 = vadd.xlane.f32.xlu0 %v143
    %v145 = vpop.xlane.xlu0 %144
    %v146 = vsel %vm125, %v142, 0.0
    %147 = vadd.xlane.f32.xlu0 %v146
    %v148 = vpop.xlane.xlu0 %147
    %v149 = vmul.f32 %v145, %v138
    %v150 = vmul.f32 %v148, %v138
    %v151 = vmul.f32 %v139, %v139
    %v152 = vmul.f32 %v140, %v140
    %v153 = vsub.f32 %v149, %v151
    %v154 = vsub.f32 %v150, %v152
    %v155 = vsub.f32 %v90, %v139
    %v156 = vsub.f32 %v92, %v140
    %v157 = vadd.f32 %v153, 1e-05
    %v158 = vadd.f32 %v154, 1e-05
    %v159 = vrsqrt.pop %v157
    %v160 = vmul.f32 %v159, %v157
    %v161 = vmul.f32 %v160, %v159
    %v162 = vmul.f32 0.5, %v161
    %v163 = vsub.f32 1.5, %v162
    %v164 = vmul.f32 %v159, %v163
    %vm165 = vweird.f32 %v157
    %vm166 = vweird.f32 %v159
    %vm167 = vmor %vm165, %vm166
    %v168 = vsel %vm167, %v159, %v164
    %v169 = vrsqrt.pop %v158
    %v170 = vmul.f32 %v169, %v158
    %v171 = vmul.f32 %v170, %v169
    %v172 = vmul.f32 0.5, %v171
    %v173 = vsub.f32 1.5, %v172
    %v174 = vmul.f32 %v169, %v173
    %vm175 = vweird.f32 %v158
    %vm176 = vweird.f32 %v169
    %vm177 = vmor %vm175, %vm176
    %v178 = vsel %vm177, %v169, %v174
    %v179 = vmul.f32 %v155, %v168
    %v180 = vmul.f32 %v156, %v178
    %v181 = vperm.slane %v48, 0
    %v182 = vmul.f32 %v179, %v181
    %v183 = vmul.f32 %v180, %v181
    %v184 = vperm.slane %v48, 1
    %v185 = vadd.f32 %v182, %v184
    %v186 = vadd.f32 %v183, %v184
    %v187 = vld [vmem:[#allocation2 + $0x8] sm:$0xf]
    %v188 = vld [vmem:[#allocation2 + $0xc] sm:$0xf]
    %v189 = vld [vmem:[#allocation2 + $0x10] sm:$0xf]
    %v190 = vld [vmem:[#allocation2 + $0x14] sm:$0xf]
    %v191 = vpack.c.bf16 %v186, %v185
    %v192 = vperm.slane %v48, 2
    %v197 = vunpack.c.l.b16 %v187
    %v198 = vunpack.c.l.b16 %v188
    %v199 = vunpack.c.l.b16 %v189
    %v200 = vunpack.c.l.b16 %v190
    %v201 = vpack.c.b16 %v198, %v197
    %v202 = vpack.c.b16 %v200, %v199
    %v206 = vsel %vm125, %v191, 0
    %208 = vmatpush.bf16.msra.mxu0 0
    %209 = vmatpush.bf16.msra.mxu0 0
    %210 = vmatpush.bf16.msra.mxu0 0
    %211 = vmatpush.bf16.msra.mxu0 0
    %212 = vmatpush.bf16.msra.mxu0 0
    %213 = vmatpush.bf16.msra.mxu0 0
    %214 = vmatpush.bf16.msra.mxu0 %v202
    %215 = vmatpush.bf16.msra.mxu0 %v201
    %216 = vmatmul.bf16.gmra.mxu0 %v206
    %v217 = vpop.f32.mrf.mxu0
    %v218 = vadd.f32 %v192, %v217
    %v219 = vpop.f32.mrf.mxu0
    %v220 = vadd.f32 %v192, %v219
    %221 = vdwg.mxu0
    %v222 = vpack.c.bf16 %v220, %v218
    %224 = vrot.lane.b32.xlu0 %v222, 96
    %v225 = vpop.permute.xlu0 %224
    %v227 = vsel %vm76, %v222, 0
    %v230 = vsel %vm76, %v225, 0
    %232 = vmatpush.bf16.xpose.msra.mxu0 0
    %233 = vmatpush.bf16.xpose.msra.mxu0 0
    %234 = vmatpush.bf16.xpose.msra.mxu0 0
    %235 = vmatpush.bf16.xpose.msra.mxu0 0
    %236 = vmatpush.bf16.xpose.msra.mxu0 0
    %237 = vmatpush.bf16.xpose.msra.mxu0 0
    %238 = vmatpush.bf16.xpose.msra.mxu0 0
    %239 = vmatpush.bf16.xpose.msra.mxu0 %v230
    %240 = vmatmul.bf16.gmra.mxu0 %v227
    %v241 = vpop.f32.mrf.mxu0
    %v242 = vadd.f32 %v123, %v241
    %v243 = vpop.f32.mrf.mxu0
    %v244 = vadd.f32 %v124, %v243
    %245 = vdwg.mxu0
    %v246 = vsel %vm76, %v242, -inf
    %247 = vmax.xlane.f32.xlu0 %v246
    %v248 = vpop.xlane.xlu0 %247
    %v249 = vsel %vm76, %v244, -inf
    %250 = vmax.xlane.f32.xlu0 %v249
    %v251 = vpop.xlane.xlu0 %250
    %v252 = vsub.f32 %v242, %v248
    %v253 = vsub.f32 %v244, %v251
    %v254 = vmul.f32 %v252, 1.442695
    %v255 = vpow.pop %v254
    %v256 = vmul.f32 %v253, 1.442695
    %v257 = vpow.pop %v256
    %v258 = vsel %vm76, %v255, 0.0
    %259 = vadd.xlane.f32.xlu0 %v258
    %v260 = vpop.xlane.xlu0 %259
    %v261 = vsel %vm76, %v257, 0.0
    %262 = vadd.xlane.f32.xlu0 %v261
    %v263 = vpop.xlane.xlu0 %262
    %v264 = vrcp.pop %v260
    %v265 = vrcp.pop %v263
    %v266 = vmul.f32 %v255, %v264
    %v267 = vmul.f32 %v257, %v265
    %v268 = vpack.c.bf16 %v267, %v266
    %269 = vrot.lane.b32.xlu0 %v222, 64
    %v270 = vpop.permute.xlu0 %269
    %v273 = vsel %vm76, %v268, 0
    %275 = vmatpush.bf16.msra.mxu0 0
    %276 = vmatpush.bf16.msra.mxu0 0
    %277 = vmatpush.bf16.msra.mxu0 0
    %278 = vmatpush.bf16.msra.mxu0 0
    %279 = vmatpush.bf16.msra.mxu0 0
    %280 = vmatpush.bf16.msra.mxu0 0
    %281 = vmatpush.bf16.msra.mxu0 0
    %282 = vmatpush.bf16.msra.mxu0 %v270
    %283 = vmatmul.bf16.gmra.mxu0 %v273
    %v284 = vpop.f32.mrf.mxu0
    %v285 = vadd.f32 0.0, %v284
    %v286 = vpop.f32.mrf.mxu0
    %v287 = vadd.f32 0.0, %v286
    %288 = vdwg.mxu0
    %289 = vrot.lane.b32.xlu0 %v222, 112
    %v290 = vpop.permute.xlu0 %289
    %291 = vrot.lane.b32.xlu0 %v222, 80
    %v292 = vpop.permute.xlu0 %291
    %v294 = vsel %vm76, %v290, 0
    %v297 = vsel %vm76, %v292, 0
    %299 = vmatpush.bf16.xpose.msra.mxu0 0
    %300 = vmatpush.bf16.xpose.msra.mxu0 0
    %301 = vmatpush.bf16.xpose.msra.mxu0 0
    %302 = vmatpush.bf16.xpose.msra.mxu0 0
    %303 = vmatpush.bf16.xpose.msra.mxu0 0
    %304 = vmatpush.bf16.xpose.msra.mxu0 0
    %305 = vmatpush.bf16.xpose.msra.mxu0 0
    %306 = vmatpush.bf16.xpose.msra.mxu0 %v297
    %307 = vmatmul.bf16.gmra.mxu0 %v294
    %v308 = vpop.f32.mrf.mxu0
    %v309 = vadd.f32 %v123, %v308
    %v310 = vpop.f32.mrf.mxu0
    %v311 = vadd.f32 %v124, %v310
    %312 = vdwg.mxu0
    %v313 = vsel %vm76, %v309, -inf
    %314 = vmax.xlane.f32.xlu0 %v313
    %v315 = vpop.xlane.xlu0 %314
    %v316 = vsel %vm76, %v311, -inf
    %317 = vmax.xlane.f32.xlu0 %v316
    %v318 = vpop.xlane.xlu0 %317
    %v319 = vsub.f32 %v309, %v315
    %v320 = vsub.f32 %v311, %v318
    %v321 = vmul.f32 %v319, 1.442695
    %v322 = vpow.pop %v321
    %v323 = vmul.f32 %v320, 1.442695
    %v324 = vpow.pop %v323
    %v325 = vsel %vm76, %v322, 0.0
    %326 = vadd.xlane.f32.xlu0 %v325
    %v327 = vpop.xlane.xlu0 %326
    %v328 = vsel %vm76, %v324, 0.0
    %329 = vadd.xlane.f32.xlu0 %v328
    %v330 = vpop.xlane.xlu0 %329
    %v331 = vrcp.pop %v327
    %v332 = vrcp.pop %v330
    %v333 = vmul.f32 %v322, %v331
    %v334 = vmul.f32 %v324, %v332
    %v335 = vpack.c.bf16 %v334, %v333
    %336 = vrot.lane.b32.xlu0 %v222, 48
    %v337 = vpop.permute.xlu0 %336
    %v340 = vsel %vm76, %v335, 0
    %342 = vmatpush.bf16.msra.mxu0 0
    %343 = vmatpush.bf16.msra.mxu0 0
    %344 = vmatpush.bf16.msra.mxu0 0
    %345 = vmatpush.bf16.msra.mxu0 0
    %346 = vmatpush.bf16.msra.mxu0 0
    %347 = vmatpush.bf16.msra.mxu0 0
    %348 = vmatpush.bf16.msra.mxu0 0
    %349 = vmatpush.bf16.msra.mxu0 %v337
    %350 = vmatmul.bf16.gmra.mxu0 %v340
    %v351 = vpop.f32.mrf.mxu0
    %v352 = vadd.f32 0.0, %v351
    %v353 = vpop.f32.mrf.mxu0
    %v354 = vadd.f32 0.0, %v353
    %355 = vdwg.mxu0
    %358 = vrot.lane.b32.xlu0 %v352, 16
    %v359 = vpop.permute.xlu0 %358
    %360 = vrot.lane.b32.xlu0 %v354, 16
    %v361 = vpop.permute.xlu0 %360
    %v364 = vsel %vm76, %v285, %v359
    %v365 = vsel %vm76, %v287, %v361
    %v366 = vld [vmem:[#allocation2 + $0x18] sm:$0xf]
    %v367 = vld [vmem:[#allocation2 + $0x1c] sm:$0xf]
    %v368 = vld [vmem:[#allocation2 + $0x20] sm:$0xf]
    %v369 = vld [vmem:[#allocation2 + $0x24] sm:$0xf]
    %v370 = vpack.c.bf16 %v365, %v364
    %v375 = vunpack.c.l.b16 %v366
    %v376 = vunpack.c.l.b16 %v367
    %v377 = vunpack.c.l.b16 %v368
    %v378 = vunpack.c.l.b16 %v369
    %v379 = vpack.c.b16 %v376, %v375
    %v380 = vpack.c.b16 %v378, %v377
    %v384 = vsel %vm125, %v370, 0
    %386 = vmatpush.bf16.msra.mxu0 0
    %387 = vmatpush.bf16.msra.mxu0 0
    %388 = vmatpush.bf16.msra.mxu0 0
    %389 = vmatpush.bf16.msra.mxu0 0
    %390 = vmatpush.bf16.msra.mxu0 0
    %391 = vmatpush.bf16.msra.mxu0 0
    %392 = vmatpush.bf16.msra.mxu0 %v380
    %393 = vmatpush.bf16.msra.mxu0 %v379
    %394 = vmatmul.bf16.gmra.mxu0 %v384
    %v395 = vpop.f32.mrf.mxu0
    %v396 = vadd.f32 0.0, %v395
    %v397 = vpop.f32.mrf.mxu0
    %v398 = vadd.f32 0.0, %v397
    %399 = vdwg.mxu0
    %v400 = vadd.f32 %v90, %v396
    %v401 = vadd.f32 %v92, %v398
    %v402 = vperm.slane %v48, 3
    %v403 = vadd.f32 %v400, %v402
    %v404 = vadd.f32 %v401, %v402
    %v405 = vsel %vm125, %v403, 0.0
    %406 = vadd.xlane.f32.xlu0 %v405
    %v407 = vpop.xlane.xlu0 %406
    %v408 = vsel %vm125, %v404, 0.0
    %409 = vadd.xlane.f32.xlu0 %v408
    %v410 = vpop.xlane.xlu0 %409
    %v411 = vmul.f32 %v407, %v138
    %v412 = vmul.f32 %v410, %v138
    %v413 = vmul.f32 %v403, %v403
    %v414 = vmul.f32 %v404, %v404
    %v415 = vsel %vm125, %v413, 0.0
    %416 = vadd.xlane.f32.xlu0 %v415
    %v417 = vpop.xlane.xlu0 %416
    %v418 = vsel %vm125, %v414, 0.0
    %419 = vadd.xlane.f32.xlu0 %v418
    %v420 = vpop.xlane.xlu0 %419
    %v421 = vmul.f32 %v417, %v138
    %v422 = vmul.f32 %v420, %v138
    %v423 = vmul.f32 %v411, %v411
    %v424 = vmul.f32 %v412, %v412
    %v425 = vsub.f32 %v421, %v423
    %v426 = vsub.f32 %v422, %v424
    %v427 = vsub.f32 %v403, %v411
    %v428 = vsub.f32 %v404, %v412
    %v429 = vadd.f32 %v425, 1e-05
    %v430 = vadd.f32 %v426, 1e-05
    %v431 = vrsqrt.pop %v429
    %v432 = vmul.f32 %v431, %v429
    %v433 = vmul.f32 %v432, %v431
    %v434 = vmul.f32 0.5, %v433
    %v435 = vsub.f32 1.5, %v434
    %v436 = vmul.f32 %v431, %v435
    %vm437 = vweird.f32 %v429
    %vm438 = vweird.f32 %v431
    %vm439 = vmor %vm437, %vm438
    %v440 = vsel %vm439, %v431, %v436
    %v441 = vrsqrt.pop %v430
    %v442 = vmul.f32 %v441, %v430
    %v443 = vmul.f32 %v442, %v441
    %v444 = vmul.f32 0.5, %v443
    %v445 = vsub.f32 1.5, %v444
    %v446 = vmul.f32 %v441, %v445
    %vm447 = vweird.f32 %v430
    %vm448 = vweird.f32 %v441
    %vm449 = vmor %vm447, %vm448
    %v450 = vsel %vm449, %v441, %v446
    %v451 = vmul.f32 %v427, %v440
    %v452 = vmul.f32 %v428, %v450
    %v453 = vperm.slane %v48, 4
    %v454 = vmul.f32 %v451, %v453
    %v455 = vmul.f32 %v452, %v453
    %v456 = vperm.slane %v48, 5
    %v457 = vadd.f32 %v454, %v456
    %v458 = vadd.f32 %v455, %v456
    %v459 = vld [vmem:[#allocation2 + $0x28] sm:$0xf]
    %v460 = vld [vmem:[#allocation2 + $0x2c] sm:$0xf]
    %v461 = vld [vmem:[#allocation2 + $0x30] sm:$0xf]
    %v462 = vld [vmem:[#allocation2 + $0x34] sm:$0xf]
    %v463 = vpack.c.bf16 %v458, %v457
    %v464 = vperm.slane %v48, 6
    %v469 = vunpack.c.l.b16 %v459
    %v470 = vunpack.c.l.b16 %v460
    %v471 = vunpack.c.l.b16 %v461
    %v472 = vunpack.c.l.b16 %v462
    %v473 = vpack.c.b16 %v470, %v469
    %v474 = vpack.c.b16 %v472, %v471
    %v478 = vsel %vm125, %v463, 0
    %480 = vmatpush.bf16.msra.mxu0 0
    %481 = vmatpush.bf16.msra.mxu0 0
    %482 = vmatpush.bf16.msra.mxu0 0
    %483 = vmatpush.bf16.msra.mxu0 0
    %484 = vmatpush.bf16.msra.mxu0 0
    %485 = vmatpush.bf16.msra.mxu0 0
    %486 = vmatpush.bf16.msra.mxu0 %v474
    %487 = vmatpush.bf16.msra.mxu0 %v473
    %488 = vmatmul.bf16.gmra.mxu0 %v478
    %v489 = vpop.f32.mrf.mxu0
    %v490 = vadd.f32 %v464, %v489
    %v491 = vpop.f32.mrf.mxu0
    %v492 = vadd.f32 %v464, %v491
    %493 = vdwg.mxu0
    %v494 = vmul.f32 %v490, %v490
    %v495 = vmul.f32 %v492, %v492
    %v496 = vmul.f32 %v490, %v494
    %v497 = vmul.f32 %v492, %v495
    %v498 = vmul.f32 %v496, 0.044715
    %v499 = vmul.f32 %v497, 0.044715
    %v500 = vadd.f32 %v490, %v498
    %v501 = vadd.f32 %v492, %v499
    %v502 = vmul.f32 %v500, 0.7978846
    %v503 = vmul.f32 %v501, 0.7978846
    %v504 = vtanh.pop %v502
    %v505 = vtanh.pop %v503
    %v506 = vadd.f32 %v504, 1.0
    %v507 = vadd.f32 %v505, 1.0
    %v508 = vmul.f32 %v506, 0.5
    %v509 = vmul.f32 %v507, 0.5
    %v510 = vmul.f32 %v490, %v508
    %v511 = vmul.f32 %v492, %v509
    %v512 = vld [vmem:[#allocation2 + $0x38] sm:$0xf]
    %v513 = vld [vmem:[#allocation2 + $0x3c] sm:$0xf]
    %v514 = vld [vmem:[#allocation2 + $0x40] sm:$0xf]
    %v515 = vld [vmem:[#allocation2 + $0x44] sm:$0xf]
    %v516 = vld [vmem:[#allocation2 + $0x48] sm:$0xf]
    %v517 = vld [vmem:[#allocation2 + $0x4c] sm:$0xf]
    %v518 = vld [vmem:[#allocation2 + $0x50] sm:$0xf]
    %v519 = vld [vmem:[#allocation2 + $0x54] sm:$0xf]
    %v520 = vld [vmem:[#allocation2 + $0x58] sm:$0xf]
    %v521 = vld [vmem:[#allocation2 + $0x5c] sm:$0xf]
    %v522 = vld [vmem:[#allocation2 + $0x60] sm:$0xf]
    %v523 = vld [vmem:[#allocation2 + $0x64] sm:$0xf]
    %v524 = vld [vmem:[#allocation2 + $0x68] sm:$0xf]
    %v525 = vld [vmem:[#allocation2 + $0x6c] sm:$0xf]
    %v526 = vld [vmem:[#allocation2 + $0x70] sm:$0xf]
    %v527 = vld [vmem:[#allocation2 + $0x74] sm:$0xf]
    %v528 = vpack.c.bf16 %v511, %v510
    %v545 = vunpack.c.l.b16 %v512
    %v546 = vunpack.c.l.b16 %v513
    %v547 = vunpack.c.l.b16 %v514
    %v548 = vunpack.c.l.b16 %v515
    %v549 = vunpack.c.l.b16 %v516
    %v550 = vunpack.c.l.b16 %v517
    %v551 = vunpack.c.l.b16 %v518
    %v552 = vunpack.c.l.b16 %v519
    %v553 = vunpack.c.l.b16 %v520
    %v554 = vunpack.c.l.b16 %v521
    %v555 = vunpack.c.l.b16 %v522
    %v556 = vunpack.c.l.b16 %v523
    %v557 = vunpack.c.l.b16 %v524
    %v558 = vunpack.c.l.b16 %v525
    %v559 = vunpack.c.l.b16 %v526
    %v560 = vunpack.c.l.b16 %v527
    %v561 = vpack.c.b16 %v546, %v545
    %v562 = vpack.c.b16 %v548, %v547
    %v563 = vpack.c.b16 %v550, %v549
    %v564 = vpack.c.b16 %v552, %v551
    %v565 = vpack.c.b16 %v554, %v553
    %v566 = vpack.c.b16 %v556, %v555
    %v567 = vpack.c.b16 %v558, %v557
    %v568 = vpack.c.b16 %v560, %v559
    %577 = vmatpush.bf16.msra.mxu0 %v568
    %578 = vmatpush.bf16.msra.mxu0 %v567
    %579 = vmatpush.bf16.msra.mxu0 %v566
    %580 = vmatpush.bf16.msra.mxu0 %v565
    %581 = vmatpush.bf16.msra.mxu0 %v564
    %582 = vmatpush.bf16.msra.mxu0 %v563
    %583 = vmatpush.bf16.msra.mxu0 %v562
    %584 = vmatpush.bf16.msra.mxu0 %v561
    %585 = vmatmul.bf16.gmra.mxu0 %v528
    %v586 = vpop.f32.mrf.mxu0
    %v587 = vadd.f32 0.0, %v586
    %v588 = vpop.f32.mrf.mxu0
    %v589 = vadd.f32 0.0, %v588
    %590 = vdwg.mxu0
    %v591 = vadd.f32 %v403, %v587
    %v592 = vadd.f32 %v404, %v589
    %v593 = vperm.slane %v48, 7
    %v594 = vadd.f32 %v591, %v593
    %v595 = vadd.f32 %v592, %v593
    %v596 = vsel %vm125, %v594, 0.0
    %597 = vadd.xlane.f32.xlu0 %v596
    %v598 = vpop.xlane.xlu0 %597
    %v599 = vsel %vm125, %v595, 0.0
    %600 = vadd.xlane.f32.xlu0 %v599
    %v601 = vpop.xlane.xlu0 %600
    %v602 = vmul.f32 %v598, %v138
    %v603 = vmul.f32 %v601, %v138
    %v604 = vmul.f32 %v594, %v594
    %v605 = vmul.f32 %v595, %v595
    %v606 = vsel %vm125, %v604, 0.0
    %607 = vadd.xlane.f32.xlu0 %v606
    %v608 = vpop.xlane.xlu0 %607
    %v609 = vsel %vm125, %v605, 0.0
    %610 = vadd.xlane.f32.xlu0 %v609
    %v611 = vpop.xlane.xlu0 %610
    %v612 = vmul.f32 %v608, %v138
    %v613 = vmul.f32 %v611, %v138
    %v614 = vmul.f32 %v602, %v602
    %v615 = vmul.f32 %v603, %v603
    %v616 = vsub.f32 %v612, %v614
    %v617 = vsub.f32 %v613, %v615
    %v618 = vsub.f32 %v594, %v602
    %v619 = vsub.f32 %v595, %v603
    %v620 = vadd.f32 %v616, 1e-05
    %v621 = vadd.f32 %v617, 1e-05
    %v622 = vrsqrt.pop %v620
    %v623 = vmul.f32 %v622, %v620
    %v624 = vmul.f32 %v623, %v622
    %v625 = vmul.f32 0.5, %v624
    %v626 = vsub.f32 1.5, %v625
    %v627 = vmul.f32 %v622, %v626
    %vm628 = vweird.f32 %v620
    %vm629 = vweird.f32 %v622
    %vm630 = vmor %vm628, %vm629
    %v631 = vsel %vm630, %v622, %v627
    %v632 = vrsqrt.pop %v621
    %v633 = vmul.f32 %v632, %v621
    %v634 = vmul.f32 %v633, %v632
    %v635 = vmul.f32 0.5, %v634
    %v636 = vsub.f32 1.5, %v635
    %v637 = vmul.f32 %v632, %v636
    %vm638 = vweird.f32 %v621
    %vm639 = vweird.f32 %v632
    %vm640 = vmor %vm638, %vm639
    %v641 = vsel %vm640, %v632, %v637
    %v642 = vmul.f32 %v618, %v631
    %v643 = vmul.f32 %v619, %v641
    %v644 = vperm.slane %v49, 0
    %v645 = vmul.f32 %v642, %v644
    %v646 = vmul.f32 %v643, %v644
    %v647 = vperm.slane %v49, 1
    %v648 = vadd.f32 %v645, %v647
    %v649 = vadd.f32 %v646, %v647
    %v650 = vld [vmem:[#allocation2 + $0x78] sm:$0xf]
    %v651 = vld [vmem:[#allocation2 + $0x7c] sm:$0xf]
    %v652 = vld [vmem:[#allocation2 + $0x80] sm:$0xf]
    %v653 = vld [vmem:[#allocation2 + $0x84] sm:$0xf]
    %v654 = vpack.c.bf16 %v649, %v648
    %v655 = vperm.slane %v49, 2
    %v660 = vunpack.c.l.b16 %v650
    %v661 = vunpack.c.l.b16 %v651
    %v662 = vunpack.c.l.b16 %v652
    %v663 = vunpack.c.l.b16 %v653
    %v664 = vpack.c.b16 %v661, %v660
    %v665 = vpack.c.b16 %v663, %v662
    %v669 = vsel %vm125, %v654, 0
    %671 = vmatpush.bf16.msra.mxu0 0
    %672 = vmatpush.bf16.msra.mxu0 0
    %673 = vmatpush.bf16.msra.mxu0 0
    %674 = vmatpush.bf16.msra.mxu0 0
    %675 = vmatpush.bf16.msra.mxu0 0
    %676 = vmatpush.bf16.msra.mxu0 0
    %677 = vmatpush.bf16.msra.mxu0 %v665
    %678 = vmatpush.bf16.msra.mxu0 %v664
    %679 = vmatmul.bf16.gmra.mxu0 %v669
    %v680 = vpop.f32.mrf.mxu0
    %v681 = vadd.f32 %v655, %v680
    %v682 = vpop.f32.mrf.mxu0
    %v683 = vadd.f32 %v655, %v682
    %684 = vdwg.mxu0
    %v685 = vpack.c.bf16 %v683, %v681
    %687 = vrot.lane.b32.xlu0 %v685, 96
    %v688 = vpop.permute.xlu0 %687
    %v690 = vsel %vm76, %v685, 0
    %v693 = vsel %vm76, %v688, 0
    %695 = vmatpush.bf16.xpose.msra.mxu0 0
    %696 = vmatpush.bf16.xpose.msra.mxu0 0
    %697 = vmatpush.bf16.xpose.msra.mxu0 0
    %698 = vmatpush.bf16.xpose.msra.mxu0 0
    %699 = vmatpush.bf16.xpose.msra.mxu0 0
    %700 = vmatpush.bf16.xpose.msra.mxu0 0
    %701 = vmatpush.bf16.xpose.msra.mxu0 0
    %702 = vmatpush.bf16.xpose.msra.mxu0 %v693
    %703 = vmatmul.bf16.gmra.mxu0 %v690
    %v704 = vpop.f32.mrf.mxu0
    %v705 = vadd.f32 %v123, %v704
    %v706 = vpop.f32.mrf.mxu0
    %v707 = vadd.f32 %v124, %v706
    %708 = vdwg.mxu0
    %v709 = vsel %vm76, %v705, -inf
    %710 = vmax.xlane.f32.xlu0 %v709
    %v711 = vpop.xlane.xlu0 %710
    %v712 = vsel %vm76, %v707, -inf
    %713 = vmax.xlane.f32.xlu0 %v712
    %v714 = vpop.xlane.xlu0 %713
    %v715 = vsub.f32 %v705, %v711
    %v716 = vsub.f32 %v707, %v714
    %v717 = vmul.f32 %v715, 1.442695
    %v718 = vpow.pop %v717
    %v719 = vmul.f32 %v716, 1.442695
    %v720 = vpow.pop %v719
    %v721 = vsel %vm76, %v718, 0.0
    %722 = vadd.xlane.f32.xlu0 %v721
    %v723 = vpop.xlane.xlu0 %722
    %v724 = vsel %vm76, %v720, 0.0
    %725 = vadd.xlane.f32.xlu0 %v724
    %v726 = vpop.xlane.xlu0 %725
    %v727 = vrcp.pop %v723
    %v728 = vrcp.pop %v726
    %v729 = vmul.f32 %v718, %v727
    %v730 = vmul.f32 %v720, %v728
    %v731 = vpack.c.bf16 %v730, %v729
    %732 = vrot.lane.b32.xlu0 %v685, 64
    %v733 = vpop.permute.xlu0 %732
    %v736 = vsel %vm76, %v731, 0
    %738 = vmatpush.bf16.msra.mxu0 0
    %739 = vmatpush.bf16.msra.mxu0 0
    %740 = vmatpush.bf16.msra.mxu0 0
    %741 = vmatpush.bf16.msra.mxu0 0
    %742 = vmatpush.bf16.msra.mxu0 0
    %743 = vmatpush.bf16.msra.mxu0 0
    %744 = vmatpush.bf16.msra.mxu0 0
    %745 = vmatpush.bf16.msra.mxu0 %v733
    %746 = vmatmul.bf16.gmra.mxu0 %v736
    %v747 = vpop.f32.mrf.mxu0
    %v748 = vadd.f32 0.0, %v747
    %v749 = vpop.f32.mrf.mxu0
    %v750 = vadd.f32 0.0, %v749
    %751 = vdwg.mxu0
    %752 = vrot.lane.b32.xlu0 %v685, 112
    %v753 = vpop.permute.xlu0 %752
    %754 = vrot.lane.b32.xlu0 %v685, 80
    %v755 = vpop.permute.xlu0 %754
    %v757 = vsel %vm76, %v753, 0
    %v760 = vsel %vm76, %v755, 0
    %762 = vmatpush.bf16.xpose.msra.mxu0 0
    %763 = vmatpush.bf16.xpose.msra.mxu0 0
    %764 = vmatpush.bf16.xpose.msra.mxu0 0
    %765 = vmatpush.bf16.xpose.msra.mxu0 0
    %766 = vmatpush.bf16.xpose.msra.mxu0 0
    %767 = vmatpush.bf16.xpose.msra.mxu0 0
    %768 = vmatpush.bf16.xpose.msra.mxu0 0
    %769 = vmatpush.bf16.xpose.msra.mxu0 %v760
    %770 = vmatmul.bf16.gmra.mxu0 %v757
    %v771 = vpop.f32.mrf.mxu0
    %v772 = vadd.f32 %v123, %v771
    %v773 = vpop.f32.mrf.mxu0
    %v774 = vadd.f32 %v124, %v773
    %775 = vdwg.mxu0
    %v776 = vsel %vm76, %v772, -inf
    %777 = vmax.xlane.f32.xlu0 %v776
    %v778 = vpop.xlane.xlu0 %777
    %v779 = vsel %vm76, %v774, -inf
    %780 = vmax.xlane.f32.xlu0 %v779
    %v781 = vpop.xlane.xlu0 %780
    %v782 = vsub.f32 %v772, %v778
    %v783 = vsub.f32 %v774, %v781
    %v784 = vmul.f32 %v782, 1.442695
    %v785 = vpow.pop %v784
    %v786 = vmul.f32 %v783, 1.442695
    %v787 = vpow.pop %v786
    %v788 = vsel %vm76, %v785, 0.0
    %789 = vadd.xlane.f32.xlu0 %v788
    %v790 = vpop.xlane.xlu0 %789
    %v791 = vsel %vm76, %v787, 0.0
    %792 = vadd.xlane.f32.xlu0 %v791
    %v793 = vpop.xlane.xlu0 %792
    %v794 = vrcp.pop %v790
    %v795 = vrcp.pop %v793
    %v796 = vmul.f32 %v785, %v794
    %v797 = vmul.f32 %v787, %v795
    %v798 = vpack.c.bf16 %v797, %v796
    %799 = vrot.lane.b32.xlu0 %v685, 48
    %v800 = vpop.permute.xlu0 %799
    %v803 = vsel %vm76, %v798, 0
    %805 = vmatpush.bf16.msra.mxu0 0
    %806 = vmatpush.bf16.msra.mxu0 0
    %807 = vmatpush.bf16.msra.mxu0 0
    %808 = vmatpush.bf16.msra.mxu0 0
    %809 = vmatpush.bf16.msra.mxu0 0
    %810 = vmatpush.bf16.msra.mxu0 0
    %811 = vmatpush.bf16.msra.mxu0 0
    %812 = vmatpush.bf16.msra.mxu0 %v800
    %813 = vmatmul.bf16.gmra.mxu0 %v803
    %v814 = vpop.f32.mrf.mxu0
    %v815 = vadd.f32 0.0, %v814
    %v816 = vpop.f32.mrf.mxu0
    %v817 = vadd.f32 0.0, %v816
    %818 = vdwg.mxu0
    %821 = vrot.lane.b32.xlu0 %v815, 16
    %v822 = vpop.permute.xlu0 %821
    %823 = vrot.lane.b32.xlu0 %v817, 16
    %v824 = vpop.permute.xlu0 %823
    %v827 = vsel %vm76, %v748, %v822
    %v828 = vsel %vm76, %v750, %v824
    %v829 = vld [vmem:[#allocation2 + $0x88] sm:$0xf]
    %v830 = vld [vmem:[#allocation2 + $0x8c] sm:$0xf]
    %v831 = vld [vmem:[#allocation2 + $0x90] sm:$0xf]
    %v832 = vld [vmem:[#allocation2 + $0x94] sm:$0xf]
    %v833 = vpack.c.bf16 %v828, %v827
    %v838 = vunpack.c.l.b16 %v829
    %v839 = vunpack.c.l.b16 %v830
    %v840 = vunpack.c.l.b16 %v831
    %v841 = vunpack.c.l.b16 %v832
    %v842 = vpack.c.b16 %v839, %v838
    %v843 = vpack.c.b16 %v841, %v840
    %v847 = vsel %vm125, %v833, 0
    %849 = vmatpush.bf16.msra.mxu0 0
    %850 = vmatpush.bf16.msra.mxu0 0
    %851 = vmatpush.bf16.msra.mxu0 0
    %852 = vmatpush.bf16.msra.mxu0 0
    %853 = vmatpush.bf16.msra.mxu0 0
    %854 = vmatpush.bf16.msra.mxu0 0
    %855 = vmatpush.bf16.msra.mxu0 %v843
    %856 = vmatpush.bf16.msra.mxu0 %v842
    %857 = vmatmul.bf16.gmra.mxu0 %v847
    %v858 = vpop.f32.mrf.mxu0
    %v859 = vadd.f32 0.0, %v858
    %v860 = vpop.f32.mrf.mxu0
    %v861 = vadd.f32 0.0, %v860
    %862 = vdwg.mxu0
    %v863 = vadd.f32 %v594, %v859
    %v864 = vadd.f32 %v595, %v861
    %v865 = vperm.slane %v49, 3
    %v866 = vadd.f32 %v863, %v865
    %v867 = vadd.f32 %v864, %v865
    %v868 = vsel %vm125, %v866, 0.0
    %869 = vadd.xlane.f32.xlu0 %v868
    %v870 = vpop.xlane.xlu0 %869
    %v871 = vsel %vm125, %v867, 0.0
    %872 = vadd.xlane.f32.xlu0 %v871
    %v873 = vpop.xlane.xlu0 %872
    %v874 = vmul.f32 %v870, %v138
    %v875 = vmul.f32 %v873, %v138
    %v876 = vmul.f32 %v866, %v866
    %v877 = vmul.f32 %v867, %v867
    %v878 = vsel %vm125, %v876, 0.0
    %879 = vadd.xlane.f32.xlu0 %v878
    %v880 = vpop.xlane.xlu0 %879
    %v881 = vsel %vm125, %v877, 0.0
    %882 = vadd.xlane.f32.xlu0 %v881
    %v883 = vpop.xlane.xlu0 %882
    %v884 = vmul.f32 %v880, %v138
    %v885 = vmul.f32 %v883, %v138
    %v886 = vmul.f32 %v874, %v874
    %v887 = vmul.f32 %v875, %v875
    %v888 = vsub.f32 %v884, %v886
    %v889 = vsub.f32 %v885, %v887
    %v890 = vsub.f32 %v866, %v874
    %v891 = vsub.f32 %v867, %v875
    %v892 = vadd.f32 %v888, 1e-05
    %v893 = vadd.f32 %v889, 1e-05
    %v894 = vrsqrt.pop %v892
    %v895 = vmul.f32 %v894, %v892
    %v896 = vmul.f32 %v895, %v894
    %v897 = vmul.f32 0.5, %v896
    %v898 = vsub.f32 1.5, %v897
    %v899 = vmul.f32 %v894, %v898
    %vm900 = vweird.f32 %v892
    %vm901 = vweird.f32 %v894
    %vm902 = vmor %vm900, %vm901
    %v903 = vsel %vm902, %v894, %v899
    %v904 = vrsqrt.pop %v893
    %v905 = vmul.f32 %v904, %v893
    %v906 = vmul.f32 %v905, %v904
    %v907 = vmul.f32 0.5, %v906
    %v908 = vsub.f32 1.5, %v907
    %v909 = vmul.f32 %v904, %v908
    %vm910 = vweird.f32 %v893
    %vm911 = vweird.f32 %v904
    %vm912 = vmor %vm910, %vm911
    %v913 = vsel %vm912, %v904, %v909
    %v914 = vmul.f32 %v890, %v903
    %v915 = vmul.f32 %v891, %v913
    %v916 = vperm.slane %v49, 4
    %v917 = vmul.f32 %v914, %v916
    %v918 = vmul.f32 %v915, %v916
    %v919 = vperm.slane %v49, 5
    %v920 = vadd.f32 %v917, %v919
    %v921 = vadd.f32 %v918, %v919
    %v922 = vld [vmem:[#allocation2 + $0x98] sm:$0xf]
    %v923 = vld [vmem:[#allocation2 + $0x9c] sm:$0xf]
    %v924 = vld [vmem:[#allocation2 + $0xa0] sm:$0xf]
    %v925 = vld [vmem:[#allocation2 + $0xa4] sm:$0xf]
    %v926 = vpack.c.bf16 %v921, %v920
    %v927 = vperm.slane %v49, 6
    %v932 = vunpack.c.l.b16 %v922
    %v933 = vunpack.c.l.b16 %v923
    %v934 = vunpack.c.l.b16 %v924
    %v935 = vunpack.c.l.b16 %v925
    %v936 = vpack.c.b16 %v933, %v932
    %v937 = vpack.c.b16 %v935, %v934
    %v941 = vsel %vm125, %v926, 0
    %943 = vmatpush.bf16.msra.mxu0 0
    %944 = vmatpush.bf16.msra.mxu0 0
    %945 = vmatpush.bf16.msra.mxu0 0
    %946 = vmatpush.bf16.msra.mxu0 0
    %947 = vmatpush.bf16.msra.mxu0 0
    %948 = vmatpush.bf16.msra.mxu0 0
    %949 = vmatpush.bf16.msra.mxu0 %v937
    %950 = vmatpush.bf16.msra.mxu0 %v936
    %951 = vmatmul.bf16.gmra.mxu0 %v941
    %v952 = vpop.f32.mrf.mxu0
    %v953 = vadd.f32 %v927, %v952
    %v954 = vpop.f32.mrf.mxu0
    %v955 = vadd.f32 %v927, %v954
    %956 = vdwg.mxu0
    %v957 = vmul.f32 %v953, %v953
    %v958 = vmul.f32 %v955, %v955
    %v959 = vmul.f32 %v953, %v957
    %v960 = vmul.f32 %v955, %v958
    %v961 = vmul.f32 %v959, 0.044715
    %v962 = vmul.f32 %v960, 0.044715
    %v963 = vadd.f32 %v953, %v961
    %v964 = vadd.f32 %v955, %v962
    %v965 = vmul.f32 %v963, 0.7978846
    %v966 = vmul.f32 %v964, 0.7978846
    %v967 = vtanh.pop %v965
    %v968 = vtanh.pop %v966
    %v969 = vadd.f32 %v967, 1.0
    %v970 = vadd.f32 %v968, 1.0
    %v971 = vmul.f32 %v969, 0.5
    %v972 = vmul.f32 %v970, 0.5
    %v973 = vmul.f32 %v953, %v971
    %v974 = vmul.f32 %v955, %v972
    %v975 = vld [vmem:[#allocation2 + $0xa8] sm:$0xf]
    %v976 = vld [vmem:[#allocation2 + $0xac] sm:$0xf]
    %v977 = vld [vmem:[#allocation2 + $0xb0] sm:$0xf]
    %v978 = vld [vmem:[#allocation2 + $0xb4] sm:$0xf]
    %v979 = vld [vmem:[#allocation2 + $0xb8] sm:$0xf]
    %v980 = vld [vmem:[#allocation2 + $0xbc] sm:$0xf]
    %v981 = vld [vmem:[#allocation2 + $0xc0] sm:$0xf]
    %v982 = vld [vmem:[#allocation2 + $0xc4] sm:$0xf]
    %v983 = vld [vmem:[#allocation2 + $0xc8] sm:$0xf]
    %v984 = vld [vmem:[#allocation2 + $0xcc] sm:$0xf]
    %v985 = vld [vmem:[#allocation2 + $0xd0] sm:$0xf]
    %v986 = vld [vmem:[#allocation2 + $0xd4] sm:$0xf]
    %v987 = vld [vmem:[#allocation2 + $0xd8] sm:$0xf]
    %v988 = vld [vmem:[#allocation2 + $0xdc] sm:$0xf]
    %v989 = vld [vmem:[#allocation2 + $0xe0] sm:$0xf]
    %v990 = vld [vmem:[#allocation2 + $0xe4] sm:$0xf]
    %v991 = vpack.c.bf16 %v974, %v973
    %v1008 = vunpack.c.l.b16 %v975
    %v1009 = vunpack.c.l.b16 %v976
    %v1010 = vunpack.c.l.b16 %v977
    %v1011 = vunpack.c.l.b16 %v978
    %v1012 = vunpack.c.l.b16 %v979
    %v1013 = vunpack.c.l.b16 %v980
    %v1014 = vunpack.c.l.b16 %v981
    %v1015 = vunpack.c.l.b16 %v982
    %v1016 = vunpack.c.l.b16 %v983
    %v1017 = vunpack.c.l.b16 %v984
    %v1018 = vunpack.c.l.b16 %v985
    %v1019 = vunpack.c.l.b16 %v986
    %v1020 = vunpack.c.l.b16 %v987
    %v1021 = vunpack.c.l.b16 %v988
    %v1022 = vunpack.c.l.b16 %v989
    %v1023 = vunpack.c.l.b16 %v990
    %v1024 = vpack.c.b16 %v1009, %v1008
    %v1025 = vpack.c.b16 %v1011, %v1010
    %v1026 = vpack.c.b16 %v1013, %v1012
    %v1027 = vpack.c.b16 %v1015, %v1014
    %v1028 = vpack.c.b16 %v1017, %v1016
    %v1029 = vpack.c.b16 %v1019, %v1018
    %v1030 = vpack.c.b16 %v1021, %v1020
    %v1031 = vpack.c.b16 %v1023, %v1022
    %1040 = vmatpush.bf16.msra.mxu0 %v1031
    %1041 = vmatpush.bf16.msra.mxu0 %v1030
    %1042 = vmatpush.bf16.msra.mxu0 %v1029
    %1043 = vmatpush.bf16.msra.mxu0 %v1028
    %1044 = vmatpush.bf16.msra.mxu0 %v1027
    %1045 = vmatpush.bf16.msra.mxu0 %v1026
    %1046 = vmatpush.bf16.msra.mxu0 %v1025
    %1047 = vmatpush.bf16.msra.mxu0 %v1024
    %1048 = vmatmul.bf16.gmra.mxu0 %v991
    %v1049 = vpop.f32.mrf.mxu0
    %v1050 = vadd.f32 0.0, %v1049
    %v1051 = vpop.f32.mrf.mxu0
    %v1052 = vadd.f32 0.0, %v1051
    %1053 = vdwg.mxu0
    %v1054 = vadd.f32 %v866, %v1050
    %v1055 = vadd.f32 %v867, %v1052
    %v1056 = vperm.slane %v49, 7
    %v1057 = vadd.f32 %v1054, %v1056
    %v1058 = vadd.f32 %v1055, %v1056
    %v1059 = vsel %vm125, %v1057, 0.0
    %1060 = vadd.xlane.f32.xlu0 %v1059
    %v1061 = vpop.xlane.xlu0 %1060
    %v1062 = vsel %vm125, %v1058, 0.0
    %1063 = vadd.xlane.f32.xlu0 %v1062
    %v1064 = vpop.xlane.xlu0 %1063
    %v1065 = vmul.f32 %v1061, %v138
    %v1066 = vmul.f32 %v1064, %v138
    %v1067 = vmul.f32 %v1057, %v1057
    %v1068 = vmul.f32 %v1058, %v1058
    %v1069 = vsel %vm125, %v1067, 0.0
    %1070 = vadd.xlane.f32.xlu0 %v1069
    %v1071 = vpop.xlane.xlu0 %1070
    %v1072 = vsel %vm125, %v1068, 0.0
    %1073 = vadd.xlane.f32.xlu0 %v1072
    %v1074 = vpop.xlane.xlu0 %1073
    %v1075 = vmul.f32 %v1071, %v138
    %v1076 = vmul.f32 %v1074, %v138
    %v1077 = vmul.f32 %v1065, %v1065
    %v1078 = vmul.f32 %v1066, %v1066
    %v1079 = vsub.f32 %v1075, %v1077
    %v1080 = vsub.f32 %v1076, %v1078
    %v1081 = vsub.f32 %v1057, %v1065
    %v1082 = vsub.f32 %v1058, %v1066
    %v1083 = vadd.f32 %v1079, 1e-05
    %v1084 = vadd.f32 %v1080, 1e-05
    %v1085 = vrsqrt.pop %v1083
    %v1086 = vmul.f32 %v1085, %v1083
    %v1087 = vmul.f32 %v1086, %v1085
    %v1088 = vmul.f32 0.5, %v1087
    %v1089 = vsub.f32 1.5, %v1088
    %v1090 = vmul.f32 %v1085, %v1089
    %vm1091 = vweird.f32 %v1083
    %vm1092 = vweird.f32 %v1085
    %vm1093 = vmor %vm1091, %vm1092
    %v1094 = vsel %vm1093, %v1085, %v1090
    %v1095 = vrsqrt.pop %v1084
    %v1096 = vmul.f32 %v1095, %v1084
    %v1097 = vmul.f32 %v1096, %v1095
    %v1098 = vmul.f32 0.5, %v1097
    %v1099 = vsub.f32 1.5, %v1098
    %v1100 = vmul.f32 %v1095, %v1099
    %vm1101 = vweird.f32 %v1084
    %vm1102 = vweird.f32 %v1095
    %vm1103 = vmor %vm1101, %vm1102
    %v1104 = vsel %vm1103, %v1095, %v1100
    %v1105 = vmul.f32 %v1081, %v1094
    %v1106 = vmul.f32 %v1082, %v1104
    %v1107 = vperm.slane %v50, 0
    %v1108 = vmul.f32 %v1105, %v1107
    %v1109 = vmul.f32 %v1106, %v1107
    %v1110 = vperm.slane %v50, 1
    %v1111 = vadd.f32 %v1108, %v1110
    %v1112 = vadd.f32 %v1109, %v1110
    %v1113 = vld [vmem:[#allocation2 + $0xe8] sm:$0xf]
    %v1114 = vld [vmem:[#allocation2 + $0xec] sm:$0xf]
    %v1115 = vld [vmem:[#allocation2 + $0xf0] sm:$0xf]
    %v1116 = vld [vmem:[#allocation2 + $0xf4] sm:$0xf]
    %v1117 = vpack.c.bf16 %v1112, %v1111
    %v1118 = vperm.slane %v50, 2
    %v1123 = vunpack.c.l.b16 %v1113
    %v1124 = vunpack.c.l.b16 %v1114
    %v1125 = vunpack.c.l.b16 %v1115
    %v1126 = vunpack.c.l.b16 %v1116
    %v1127 = vpack.c.b16 %v1124, %v1123
    %v1128 = vpack.c.b16 %v1126, %v1125
    %v1132 = vsel %vm125, %v1117, 0
    %1134 = vmatpush.bf16.msra.mxu0 0
    %1135 = vmatpush.bf16.msra.mxu0 0
    %1136 = vmatpush.bf16.msra.mxu0 0
    %1137 = vmatpush.bf16.msra.mxu0 0
    %1138 = vmatpush.bf16.msra.mxu0 0
    %1139 = vmatpush.bf16.msra.mxu0 0
    %1140 = vmatpush.bf16.msra.mxu0 %v1128
    %1141 = vmatpush.bf16.msra.mxu0 %v1127
    %1142 = vmatmul.bf16.gmra.mxu0 %v1132
    %v1143 = vpop.f32.mrf.mxu0
    %v1144 = vadd.f32 %v1118, %v1143
    %v1145 = vpop.f32.mrf.mxu0
    %v1146 = vadd.f32 %v1118, %v1145
    %1147 = vdwg.mxu0
    %1148 = vst [vmem:[%s3] sm:$0xff] %v1144
    %1149 = vst [vmem:[%s3 + $0x8] sm:$0xff] %v1146
    // Predicated region
    $region22: #{ppo_agent_forward.1} parent=1 // pred_check
      _
    $region23: #{ppo_agent_forward.1} parent=1 // pred_check_branch
      %1151 = sbr.rel (0) target = $region25
    $region24: #{ppo_agent_forward.1} parent=1 // pred_region
      _
    $region25: #{ppo_agent_forward.1} parent=1 // pred_fallthru
      _
    // Predicated region
    $region26: #{ppo_agent_forward.1} parent=1 // pred_check
      _
    $region27: #{ppo_agent_forward.1} parent=1 // pred_check_branch
      %1153 = sbr.rel (0) target = $region29
    $region28: #{ppo_agent_forward.1} parent=1 // pred_region
      _
    $region29: #{ppo_agent_forward.1} parent=1 // pred_fallthru
      _
    %1154 = vsyncpa [#allocation3], 1
    %1155 = vsyncpa [#allocation5], 1

</llo_original>
